<compile_context>
chip_gen: v7x
topology: tpu7x:2x2x1
jax: 0.10.0
libtpu: 0.0.40
codegen_flags: <defaults>
</compile_context>

<pallas_src>
import math
import jax
import jax.numpy as jnp
from jax.experimental import pallas as pl
from jax.experimental.pallas import tpu as pltpu

# ----------------------------- config (synthetic) -----------------------------
VOCAB = 50
VOCAB_PAD = 64          # zero-padded table rows -> clean matmul contraction dim
EMBED_DIM = 32
HIDDEN = 32
NUM_LAYERS = 2
NUM_DIRS = 2            # bidirectional
BATCH = 2
SEQ = 8


# ------------------------------ fused Pallas kernel ---------------------------
def fused_model_kernel(ids_ref, gx0_tab_ref, b0_ref, whhbd0_ref,
                       wih1_ref, b1_ref, whhbd1_ref,
                       w1_ref, fb1_ref, w2_ref, fb2_ref,
                       out_ref):
    """Whole model in one kernel invocation (grid=()).

    ids_ref    : (T*B, 1) int32, row r = t*B + b holds token id for (batch b, time t)
    gx0_tab_ref: (VOCAB_PAD, 8H) bf16  = emb_pad @ [W_ih_f^T | W_ih_b^T]   (layer 0)
    whhbd{l}   : (2H, 4H) bf16         = [W_hh_f^T ; W_hh_b^T]  (vertical stack)
    wih1       : (2H, 8H) bf16         = [W_ih_f^T | W_ih_b^T]             (layer 1)
    b{l}       : (1, 8H) f32           = [b_ih_f + b_hh_f | b_ih_b + b_hh_b]
    w1/w2      : (2H,32)/(32,2) bf16 head weights (transposed), fb1/fb2 f32 biases
    out_ref    : (B, 2) f32 log-probabilities
    """
    T, B, H = SEQ, BATCH, HIDDEN
    TB = T * B

    # ---- constant masks, hoisted once and shared by both layers -------------
    row2b = jax.lax.broadcasted_iota(jnp.int32, (2 * B, 2 * H), 0)
    lane2h = jax.lax.broadcasted_iota(jnp.int32, (2 * B, 2 * H), 1)
    hmask = (row2b < B) == (lane2h < H)            # block-diag placement of [h_f|h_b]
    lane4h = jax.lax.broadcasted_iota(jnp.int32, (2 * B, 4 * H), 1)
    gmask = (lane4h >= 2 * H) & (lane4h < 3 * H)   # g-gate lanes -> tanh

    # ---- embedding folded into layer-0 input projection (one-hot matmul) ----
    ids = ids_ref[...]                                              # (TB, 1) i32
    vocab_iota = jax.lax.broadcasted_iota(jnp.int32, (TB, VOCAB_PAD), 1)
    one_hot = (vocab_iota == ids).astype(jnp.bfloat16)              # (TB, 64) bf16
    gx0 = jnp.dot(one_hot, gx0_tab_ref[...],
                  preferred_element_type=jnp.float32) + b0_ref[...]  # (TB, 8H) f32

    def run_layer(gx, whh_bd_ref, collect):
        """gx: (TB, 8H) f32 precomputed input gates [fwd | bwd] for all steps.

        Returns the merged final state (2B, H) (rows 0:B fwd, B:2B bwd) and,
        if `collect`, the per-timestep hidden states as Python lists of values.
        """
        whh_bd = whh_bd_ref[...]                                    # (2H, 4H) bf16

        # Per-step input-gate blocks, stacked [fwd(t) ; bwd(T-1-t)] along sublanes.
        # No dependence on the recurrence -> scheduler can hoist/overlap freely.
        gx_steps = []
        for t in range(T):
            tb = T - 1 - t
            gx_steps.append(jnp.concatenate(
                [gx[t * B:(t + 1) * B, 0:4 * H],
                 gx[tb * B:(tb + 1) * B, 4 * H:8 * H]], axis=0))    # (2B, 4H)

        h = jnp.zeros((2 * B, H), jnp.float32)     # rows 0:B fwd, rows B:2B bwd
        c = jnp.zeros((2 * B, H), jnp.float32)
        hf_list, hb_list = [None] * T, [None] * T

        # Fully unrolled (T=8): static slices, full scheduler visibility.
        for t in range(T):
            # Block-diagonal placement: rows 0:B -> [h_f | 0], rows B:2B -> [0 | h_b]
            h_bf = h.astype(jnp.bfloat16)
            h_tiled = jnp.concatenate([h_bf, h_bf], axis=1)          # (2B, 2H)
            h_wide = jnp.where(hmask, h_tiled, jnp.zeros_like(h_tiled))
            # ONE recurrent MXU push for both directions.
            gates = gx_steps[t] + jnp.dot(h_wide, whh_bd,
                                          preferred_element_type=jnp.float32)
            # ONE sigmoid + ONE tanh over the full (2B, 4H) row; g via lane mask.
            s = jax.nn.sigmoid(gates)
            tg = jnp.tanh(gates)
            act = jnp.where(gmask, tg, s)                            # [i | f | g | o]
            # i*g: align g onto the i lanes with an XLU roll (2H == -2H mod 4H).
            ig = (act * pltpu.roll(act, 2 * H, axis=1))[:, 0:H]
            c = act[:, H:2 * H] * c + ig
            h = act[:, 3 * H:4 * H] * jnp.tanh(c)
            if collect:
                hf_list[t] = h[0:B, :]             # forward hidden at time t
                hb_list[T - 1 - t] = h[B:2 * B, :]  # backward hidden at time T-1-t
        return h, hf_list, hb_list

    # ---- layer 0: hidden sequence kept as values (no scratch, no stores) ----
    _, hf0, hb0 = run_layer(gx0, whhbd0_ref, collect=True)
    x1 = jnp.concatenate(
        [jnp.concatenate([hf0[t], hb0[t]], axis=1) for t in range(T)],
        axis=0)                                                      # (TB, 2H) f32
    gx1 = jnp.dot(x1.astype(jnp.bfloat16), wih1_ref[...],
                  preferred_element_type=jnp.float32) + b1_ref[...]  # (TB, 8H) f32

    # ---- layer 1: only the final hidden states are needed -------------------
    h1, _, _ = run_layer(gx1, whhbd1_ref, collect=False)

    # ---- classifier head: concat -> fc1 -> relu -> fc2 -> log_softmax -------
    xh = jnp.concatenate([h1[0:B, :], h1[B:2 * B, :]], axis=1)       # (B, 2H)
    z1 = jnp.dot(xh.astype(jnp.bfloat16), w1_ref[...],
                 preferred_element_type=jnp.float32) + fb1_ref[...]
    z1 = jnp.maximum(z1, 0.0)
    z2 = jnp.dot(z1.astype(jnp.bfloat16), w2_ref[...],
                 preferred_element_type=jnp.float32) + fb2_ref[...]
    m = jnp.max(z2, axis=-1, keepdims=True)
    lse = m + jnp.log(jnp.sum(jnp.exp(z2 - m), axis=-1, keepdims=True))
    out_ref[...] = z2 - lse


_NUM_INPUTS = 11
_fused = pl.pallas_call(
    fused_model_kernel,
    out_shape=jax.ShapeDtypeStruct((BATCH, 2), jnp.float32),
    in_specs=[pl.BlockSpec(memory_space=pltpu.MemorySpace.VMEM)] * _NUM_INPUTS,
    out_specs=pl.BlockSpec(memory_space=pltpu.MemorySpace.VMEM),
    compiler_params=pltpu.CompilerParams(vmem_limit_bytes=4 * 1024 * 1024),
    cost_estimate=pl.CostEstimate(flops=2_200_000, transcendentals=19_000,
                                  bytes_accessed=120_000),
)


# ------------------------------- parameter init --------------------------------
def init_params(key):
    params = {}
    k_emb, key = jax.random.split(key)
    params["embedding"] = jax.random.normal(k_emb, (VOCAB, EMBED_DIM), jnp.float32)

    k = 1.0 / math.sqrt(HIDDEN)
    lstm = []
    for layer in range(NUM_LAYERS):
        din = EMBED_DIM if layer == 0 else NUM_DIRS * HIDDEN
        dirs = []
        for _ in range(NUM_DIRS):
            key, k1, k2, k3, k4 = jax.random.split(key, 5)
            dirs.append({
                "w_ih": jax.random.uniform(k1, (4 * HIDDEN, din), jnp.float32, -k, k),
                "w_hh": jax.random.uniform(k2, (4 * HIDDEN, HIDDEN), jnp.float32, -k, k),
                "b_ih": jax.random.uniform(k3, (4 * HIDDEN,), jnp.float32, -k, k),
                "b_hh": jax.random.uniform(k4, (4 * HIDDEN,), jnp.float32, -k, k),
            })
        lstm.append(dirs)
    params["lstm"] = lstm

    key, k1, k2, k3, k4 = jax.random.split(key, 5)
    kf1 = 1.0 / math.sqrt(NUM_DIRS * HIDDEN)
    params["fc1_w"] = jax.random.uniform(k1, (32, NUM_DIRS * HIDDEN), jnp.float32, -kf1, kf1)
    params["fc1_b"] = jax.random.uniform(k2, (32,), jnp.float32, -kf1, kf1)
    kf2 = 1.0 / math.sqrt(32)
    params["fc2_w"] = jax.random.uniform(k3, (2, 32), jnp.float32, -kf2, kf2)
    params["fc2_b"] = jax.random.uniform(k4, (2,), jnp.float32, -kf2, kf2)
    return params


def prepare_operands(params):
    """One-time weight prep: transposes, direction concat/stack, embedding fold,
    bf16 casts.  Order matches the kernel's argument list (after ids)."""
    H = HIDDEN
    emb_pad = jnp.zeros((VOCAB_PAD, EMBED_DIM), jnp.float32)
    emb_pad = emb_pad.at[:VOCAB].set(params["embedding"])

    def layer_ops(layer):
        pf, pb = params["lstm"][layer]
        wih = jnp.concatenate([pf["w_ih"].T, pb["w_ih"].T], axis=1)        # (Din, 8H)
        whh_bd = jnp.concatenate([pf["w_hh"].T, pb["w_hh"].T], axis=0)     # (2H, 4H)
        b = jnp.concatenate([pf["b_ih"] + pf["b_hh"],
                             pb["b_ih"] + pb["b_hh"]]).reshape(1, 8 * H)
        return wih, whh_bd, b

    wih0, whh_bd0, b0 = layer_ops(0)
    wih1, whh_bd1, b1 = layer_ops(1)
    # Fold the embedding into the layer-0 input projection (one-hot row select).
    gx0_table = (emb_pad @ wih0).astype(jnp.bfloat16)                      # (64, 8H)

    return [gx0_table,
            b0.astype(jnp.float32),
            whh_bd0.astype(jnp.bfloat16),
            wih1.astype(jnp.bfloat16),
            b1.astype(jnp.float32),
            whh_bd1.astype(jnp.bfloat16),
            params["fc1_w"].T.astype(jnp.bfloat16),                        # (2H, 32)
            params["fc1_b"].reshape(1, -1).astype(jnp.float32),
            params["fc2_w"].T.astype(jnp.bfloat16),                        # (32, 2)
            params["fc2_b"].reshape(1, -1).astype(jnp.float32)]


# ---------------------------------- forward ------------------------------------
@jax.jit
def forward(operands, ids):
    # Only host-side glue: time-major flatten of the (B, T) int ids.
    ids_tm = jnp.transpose(ids).reshape(SEQ * BATCH, 1).astype(jnp.int32)
    return _fused(ids_tm, *operands)


# ----------------------------------- main ---------------------------------------
if __name__ == "__main__":
    key = jax.random.PRNGKey(0)
    k_ids, k_par = jax.random.split(key)
    ids = jax.random.randint(k_ids, (BATCH, SEQ), 0, VOCAB, dtype=jnp.int32)
    params = init_params(k_par)
    operands = prepare_operands(params)

    out = forward(operands, ids)                 # (BATCH, 2) log-probabilities
    out = jax.block_until_ready(out)

    assert out.shape == (BATCH, 2)
    # log_softmax rows should (approximately) exponentiate-sum to 1
    assert bool(jnp.all(jnp.abs(jnp.sum(jnp.exp(out), axis=-1) - 1.0) < 1e-4))
    print("KERNEL_OK")
</pallas_src>

<mosaic_0001>
module attributes {stable_mosaic.version = 11 : i64} {
  func.func @fused_model_kernel(%arg0: memref<16x1xi32, #tpu.memory_space<vmem>>, %arg1: memref<64x256xbf16, #tpu.memory_space<vmem>>, %arg2: memref<1x256xf32, #tpu.memory_space<vmem>>, %arg3: memref<64x128xbf16, #tpu.memory_space<vmem>>, %arg4: memref<64x256xbf16, #tpu.memory_space<vmem>>, %arg5: memref<1x256xf32, #tpu.memory_space<vmem>>, %arg6: memref<64x128xbf16, #tpu.memory_space<vmem>>, %arg7: memref<64x32xbf16, #tpu.memory_space<vmem>>, %arg8: memref<1x32xf32, #tpu.memory_space<vmem>>, %arg9: memref<32x2xbf16, #tpu.memory_space<vmem>>, %arg10: memref<1x2xf32, #tpu.memory_space<vmem>>, %arg11: memref<2x2xf32, #tpu.memory_space<vmem>>) attributes {dimension_semantics = [], scalar_prefetch = 0 : i64, scratch_operands = 0 : i64, tpu.core_type = #tpu.core_type<tc>} {
    %0 = tpu.iota {dimensions = array<i32: 0>} : vector<4x64xi32>
    %1 = tpu.iota {dimensions = array<i32: 1>} : vector<4x64xi32>
    %c2_i32 = arith.constant 2 : i32
    %2 = vector.broadcast %c2_i32 : i32 to vector<4x64xi32>
    %3 = arith.cmpi slt, %0, %2 : vector<4x64xi32>
    %c32_i32 = arith.constant 32 : i32
    %4 = vector.broadcast %c32_i32 : i32 to vector<4x64xi32>
    %5 = arith.cmpi slt, %1, %4 : vector<4x64xi32>
    %6 = arith.xori %3, %5 : vector<4x64xi1>
    %cst = arith.constant dense<true> : vector<4x64xi1>
    %7 = arith.xori %6, %cst : vector<4x64xi1>
    %8 = tpu.iota {dimensions = array<i32: 1>} : vector<4x128xi32>
    %c64_i32 = arith.constant 64 : i32
    %9 = vector.broadcast %c64_i32 : i32 to vector<4x128xi32>
    %10 = arith.cmpi sge, %8, %9 : vector<4x128xi32>
    %c96_i32 = arith.constant 96 : i32
    %11 = vector.broadcast %c96_i32 : i32 to vector<4x128xi32>
    %12 = arith.cmpi slt, %8, %11 : vector<4x128xi32>
    %13 = arith.andi %10, %12 : vector<4x128xi1>
    %c0 = arith.constant 0 : index
    %c0_0 = arith.constant 0 : index
    %14 = vector.load %arg0[%c0, %c0_0] : memref<16x1xi32, #tpu.memory_space<vmem>>, vector<16x1xi32>
    %15 = tpu.iota {dimensions = array<i32: 1>} : vector<16x64xi32>
    %16 = vector.broadcast %14 : vector<16x1xi32> to vector<16x64xi32>
    %17 = arith.cmpi eq, %15, %16 : vector<16x64xi32>
    %18 = arith.extui %17 : vector<16x64xi1> to vector<16x64xi32>
    %19 = arith.sitofp %18 : vector<16x64xi32> to vector<16x64xf32>
    %20 = arith.truncf %19 : vector<16x64xf32> to vector<16x64xbf16>
    %c0_1 = arith.constant 0 : index
    %c0_2 = arith.constant 0 : index
    %21 = vector.load %arg1[%c0_1, %c0_2] : memref<64x256xbf16, #tpu.memory_space<vmem>>, vector<64x256xbf16>
    %cst_3 = arith.constant dense<0.000000e+00> : vector<16x256xf32>
    %22 = tpu.matmul %20, %21, %cst_3 {dimension_numbers = #tpu.dot_dimension_numbers<[1], [0], [0], [1], [0, 0, 1, 1], [], []>} : vector<16x64xbf16>, vector<64x256xbf16>, vector<16x256xf32> -> vector<16x256xf32>
    %c0_4 = arith.constant 0 : index
    %c0_5 = arith.constant 0 : index
    %23 = vector.load %arg2[%c0_4, %c0_5] : memref<1x256xf32, #tpu.memory_space<vmem>>, vector<1x256xf32>
    %24 = vector.broadcast %23 : vector<1x256xf32> to vector<16x256xf32>
    %25 = arith.addf %22, %24 : vector<16x256xf32>
    %c0_6 = arith.constant 0 : index
    %c0_7 = arith.constant 0 : index
    %26 = vector.load %arg3[%c0_6, %c0_7] : memref<64x128xbf16, #tpu.memory_space<vmem>>, vector<64x128xbf16>
    %27 = vector.extract_strided_slice %25 {offsets = [0, 0], sizes = [2, 128], strides = [1, 1]} : vector<16x256xf32> to vector<2x128xf32>
    %28 = vector.extract_strided_slice %25 {offsets = [14, 128], sizes = [2, 128], strides = [1, 1]} : vector<16x256xf32> to vector<2x128xf32>
    %29 = tpu.concatenate %27, %28 in 0 : vector<2x128xf32>, vector<2x128xf32> -> vector<4x128xf32>
    %30 = vector.extract_strided_slice %25 {offsets = [2, 0], sizes = [2, 128], strides = [1, 1]} : vector<16x256xf32> to vector<2x128xf32>
    %31 = vector.extract_strided_slice %25 {offsets = [12, 128], sizes = [2, 128], strides = [1, 1]} : vector<16x256xf32> to vector<2x128xf32>
    %32 = tpu.concatenate %30, %31 in 0 : vector<2x128xf32>, vector<2x128xf32> -> vector<4x128xf32>
    %33 = vector.extract_strided_slice %25 {offsets = [4, 0], sizes = [2, 128], strides = [1, 1]} : vector<16x256xf32> to vector<2x128xf32>
    %34 = vector.extract_strided_slice %25 {offsets = [10, 128], sizes = [2, 128], strides = [1, 1]} : vector<16x256xf32> to vector<2x128xf32>
    %35 = tpu.concatenate %33, %34 in 0 : vector<2x128xf32>, vector<2x128xf32> -> vector<4x128xf32>
    %36 = vector.extract_strided_slice %25 {offsets = [6, 0], sizes = [2, 128], strides = [1, 1]} : vector<16x256xf32> to vector<2x128xf32>
    %37 = vector.extract_strided_slice %25 {offsets = [8, 128], sizes = [2, 128], strides = [1, 1]} : vector<16x256xf32> to vector<2x128xf32>
    %38 = tpu.concatenate %36, %37 in 0 : vector<2x128xf32>, vector<2x128xf32> -> vector<4x128xf32>
    %39 = vector.extract_strided_slice %25 {offsets = [8, 0], sizes = [2, 128], strides = [1, 1]} : vector<16x256xf32> to vector<2x128xf32>
    %40 = vector.extract_strided_slice %25 {offsets = [6, 128], sizes = [2, 128], strides = [1, 1]} : vector<16x256xf32> to vector<2x128xf32>
    %41 = tpu.concatenate %39, %40 in 0 : vector<2x128xf32>, vector<2x128xf32> -> vector<4x128xf32>
    %42 = vector.extract_strided_slice %25 {offsets = [10, 0], sizes = [2, 128], strides = [1, 1]} : vector<16x256xf32> to vector<2x128xf32>
    %43 = vector.extract_strided_slice %25 {offsets = [4, 128], sizes = [2, 128], strides = [1, 1]} : vector<16x256xf32> to vector<2x128xf32>
    %44 = tpu.concatenate %42, %43 in 0 : vector<2x128xf32>, vector<2x128xf32> -> vector<4x128xf32>
    %45 = vector.extract_strided_slice %25 {offsets = [12, 0], sizes = [2, 128], strides = [1, 1]} : vector<16x256xf32> to vector<2x128xf32>
    %46 = vector.extract_strided_slice %25 {offsets = [2, 128], sizes = [2, 128], strides = [1, 1]} : vector<16x256xf32> to vector<2x128xf32>
    %47 = tpu.concatenate %45, %46 in 0 : vector<2x128xf32>, vector<2x128xf32> -> vector<4x128xf32>
    %48 = vector.extract_strided_slice %25 {offsets = [14, 0], sizes = [2, 128], strides = [1, 1]} : vector<16x256xf32> to vector<2x128xf32>
    %49 = vector.extract_strided_slice %25 {offsets = [0, 128], sizes = [2, 128], strides = [1, 1]} : vector<16x256xf32> to vector<2x128xf32>
    %50 = tpu.concatenate %48, %49 in 0 : vector<2x128xf32>, vector<2x128xf32> -> vector<4x128xf32>
    %cst_8 = arith.constant 0.000000e+00 : f32
    %51 = vector.broadcast %cst_8 : f32 to vector<4x32xf32>
    %cst_9 = arith.constant 0.000000e+00 : f32
    %52 = vector.broadcast %cst_9 : f32 to vector<4x32xf32>
    %53 = arith.truncf %51 : vector<4x32xf32> to vector<4x32xbf16>
    %54 = tpu.concatenate %53, %53 in 1 : vector<4x32xbf16>, vector<4x32xbf16> -> vector<4x64xbf16>
    %cst_10 = arith.constant 0.000000e+00 : bf16
    %55 = vector.broadcast %cst_10 : bf16 to vector<4x64xbf16>
    %56 = arith.select %7, %54, %55 : vector<4x64xi1>, vector<4x64xbf16>
    %cst_11 = arith.constant dense<0.000000e+00> : vector<4x128xf32>
    %57 = tpu.matmul %56, %26, %cst_11 {dimension_numbers = #tpu.dot_dimension_numbers<[1], [0], [0], [1], [0, 0, 1, 1], [], []>} : vector<4x64xbf16>, vector<64x128xbf16>, vector<4x128xf32> -> vector<4x128xf32>
    %58 = arith.addf %29, %57 : vector<4x128xf32>
    %59 = arith.negf %58 : vector<4x128xf32>
    %60 = math.exp %59 : vector<4x128xf32>
    %cst_12 = arith.constant 1.000000e+00 : f32
    %61 = vector.broadcast %cst_12 : f32 to vector<4x128xf32>
    %62 = arith.addf %61, %60 : vector<4x128xf32>
    %63 = arith.divf %61, %62 : vector<4x128xf32>
    %64 = math.tanh %58 : vector<4x128xf32>
    %65 = arith.select %13, %64, %63 : vector<4x128xi1>, vector<4x128xf32>
    %c64_i32_13 = arith.constant 64 : i32
    %66 = tpu.dynamic_rotate %65 by %c64_i32_13 dim 1 : vector<4x128xf32>, i32 -> vector<4x128xf32>
    %67 = arith.mulf %65, %66 : vector<4x128xf32>
    %68 = vector.extract_strided_slice %67 {offsets = [0, 0], sizes = [4, 32], strides = [1, 1]} : vector<4x128xf32> to vector<4x32xf32>
    %69 = vector.extract_strided_slice %65 {offsets = [0, 32], sizes = [4, 32], strides = [1, 1]} : vector<4x128xf32> to vector<4x32xf32>
    %70 = arith.mulf %69, %52 : vector<4x32xf32>
    %71 = arith.addf %70, %68 : vector<4x32xf32>
    %72 = vector.extract_strided_slice %65 {offsets = [0, 96], sizes = [4, 32], strides = [1, 1]} : vector<4x128xf32> to vector<4x32xf32>
    %73 = math.tanh %71 : vector<4x32xf32>
    %74 = arith.mulf %72, %73 : vector<4x32xf32>
    %75 = vector.extract_strided_slice %74 {offsets = [0, 0], sizes = [2, 32], strides = [1, 1]} : vector<4x32xf32> to vector<2x32xf32>
    %76 = vector.extract_strided_slice %74 {offsets = [2, 0], sizes = [2, 32], strides = [1, 1]} : vector<4x32xf32> to vector<2x32xf32>
    %77 = arith.truncf %74 : vector<4x32xf32> to vector<4x32xbf16>
    %78 = tpu.concatenate %77, %77 in 1 : vector<4x32xbf16>, vector<4x32xbf16> -> vector<4x64xbf16>
    %cst_14 = arith.constant 0.000000e+00 : bf16
    %79 = vector.broadcast %cst_14 : bf16 to vector<4x64xbf16>
    %80 = arith.select %7, %78, %79 : vector<4x64xi1>, vector<4x64xbf16>
    %cst_15 = arith.constant dense<0.000000e+00> : vector<4x128xf32>
    %81 = tpu.matmul %80, %26, %cst_15 {dimension_numbers = #tpu.dot_dimension_numbers<[1], [0], [0], [1], [0, 0, 1, 1], [], []>} : vector<4x64xbf16>, vector<64x128xbf16>, vector<4x128xf32> -> vector<4x128xf32>
    %82 = arith.addf %32, %81 : vector<4x128xf32>
    %83 = arith.negf %82 : vector<4x128xf32>
    %84 = math.exp %83 : vector<4x128xf32>
    %cst_16 = arith.constant 1.000000e+00 : f32
    %85 = vector.broadcast %cst_16 : f32 to vector<4x128xf32>
    %86 = arith.addf %85, %84 : vector<4x128xf32>
    %87 = arith.divf %85, %86 : vector<4x128xf32>
    %88 = math.tanh %82 : vector<4x128xf32>
    %89 = arith.select %13, %88, %87 : vector<4x128xi1>, vector<4x128xf32>
    %c64_i32_17 = arith.constant 64 : i32
    %90 = tpu.dynamic_rotate %89 by %c64_i32_17 dim 1 : vector<4x128xf32>, i32 -> vector<4x128xf32>
    %91 = arith.mulf %89, %90 : vector<4x128xf32>
    %92 = vector.extract_strided_slice %91 {offsets = [0, 0], sizes = [4, 32], strides = [1, 1]} : vector<4x128xf32> to vector<4x32xf32>
    %93 = vector.extract_strided_slice %89 {offsets = [0, 32], sizes = [4, 32], strides = [1, 1]} : vector<4x128xf32> to vector<4x32xf32>
    %94 = arith.mulf %93, %71 : vector<4x32xf32>
    %95 = arith.addf %94, %92 : vector<4x32xf32>
    %96 = vector.extract_strided_slice %89 {offsets = [0, 96], sizes = [4, 32], strides = [1, 1]} : vector<4x128xf32> to vector<4x32xf32>
    %97 = math.tanh %95 : vector<4x32xf32>
    %98 = arith.mulf %96, %97 : vector<4x32xf32>
    %99 = vector.extract_strided_slice %98 {offsets = [0, 0], sizes = [2, 32], strides = [1, 1]} : vector<4x32xf32> to vector<2x32xf32>
    %100 = vector.extract_strided_slice %98 {offsets = [2, 0], sizes = [2, 32], strides = [1, 1]} : vector<4x32xf32> to vector<2x32xf32>
    %101 = arith.truncf %98 : vector<4x32xf32> to vector<4x32xbf16>
    %102 = tpu.concatenate %101, %101 in 1 : vector<4x32xbf16>, vector<4x32xbf16> -> vector<4x64xbf16>
    %cst_18 = arith.constant 0.000000e+00 : bf16
    %103 = vector.broadcast %cst_18 : bf16 to vector<4x64xbf16>
    %104 = arith.select %7, %102, %103 : vector<4x64xi1>, vector<4x64xbf16>
    %cst_19 = arith.constant dense<0.000000e+00> : vector<4x128xf32>
    %105 = tpu.matmul %104, %26, %cst_19 {dimension_numbers = #tpu.dot_dimension_numbers<[1], [0], [0], [1], [0, 0, 1, 1], [], []>} : vector<4x64xbf16>, vector<64x128xbf16>, vector<4x128xf32> -> vector<4x128xf32>
    %106 = arith.addf %35, %105 : vector<4x128xf32>
    %107 = arith.negf %106 : vector<4x128xf32>
    %108 = math.exp %107 : vector<4x128xf32>
    %cst_20 = arith.constant 1.000000e+00 : f32
    %109 = vector.broadcast %cst_20 : f32 to vector<4x128xf32>
    %110 = arith.addf %109, %108 : vector<4x128xf32>
    %111 = arith.divf %109, %110 : vector<4x128xf32>
    %112 = math.tanh %106 : vector<4x128xf32>
    %113 = arith.select %13, %112, %111 : vector<4x128xi1>, vector<4x128xf32>
    %c64_i32_21 = arith.constant 64 : i32
    %114 = tpu.dynamic_rotate %113 by %c64_i32_21 dim 1 : vector<4x128xf32>, i32 -> vector<4x128xf32>
    %115 = arith.mulf %113, %114 : vector<4x128xf32>
    %116 = vector.extract_strided_slice %115 {offsets = [0, 0], sizes = [4, 32], strides = [1, 1]} : vector<4x128xf32> to vector<4x32xf32>
    %117 = vector.extract_strided_slice %113 {offsets = [0, 32], sizes = [4, 32], strides = [1, 1]} : vector<4x128xf32> to vector<4x32xf32>
    %118 = arith.mulf %117, %95 : vector<4x32xf32>
    %119 = arith.addf %118, %116 : vector<4x32xf32>
    %120 = vector.extract_strided_slice %113 {offsets = [0, 96], sizes = [4, 32], strides = [1, 1]} : vector<4x128xf32> to vector<4x32xf32>
    %121 = math.tanh %119 : vector<4x32xf32>
    %122 = arith.mulf %120, %121 : vector<4x32xf32>
    %123 = vector.extract_strided_slice %122 {offsets = [0, 0], sizes = [2, 32], strides = [1, 1]} : vector<4x32xf32> to vector<2x32xf32>
    %124 = vector.extract_strided_slice %122 {offsets = [2, 0], sizes = [2, 32], strides = [1, 1]} : vector<4x32xf32> to vector<2x32xf32>
    %125 = arith.truncf %122 : vector<4x32xf32> to vector<4x32xbf16>
    %126 = tpu.concatenate %125, %125 in 1 : vector<4x32xbf16>, vector<4x32xbf16> -> vector<4x64xbf16>
    %cst_22 = arith.constant 0.000000e+00 : bf16
    %127 = vector.broadcast %cst_22 : bf16 to vector<4x64xbf16>
    %128 = arith.select %7, %126, %127 : vector<4x64xi1>, vector<4x64xbf16>
    %cst_23 = arith.constant dense<0.000000e+00> : vector<4x128xf32>
    %129 = tpu.matmul %128, %26, %cst_23 {dimension_numbers = #tpu.dot_dimension_numbers<[1], [0], [0], [1], [0, 0, 1, 1], [], []>} : vector<4x64xbf16>, vector<64x128xbf16>, vector<4x128xf32> -> vector<4x128xf32>
    %130 = arith.addf %38, %129 : vector<4x128xf32>
    %131 = arith.negf %130 : vector<4x128xf32>
    %132 = math.exp %131 : vector<4x128xf32>
    %cst_24 = arith.constant 1.000000e+00 : f32
    %133 = vector.broadcast %cst_24 : f32 to vector<4x128xf32>
    %134 = arith.addf %133, %132 : vector<4x128xf32>
    %135 = arith.divf %133, %134 : vector<4x128xf32>
    %136 = math.tanh %130 : vector<4x128xf32>
    %137 = arith.select %13, %136, %135 : vector<4x128xi1>, vector<4x128xf32>
    %c64_i32_25 = arith.constant 64 : i32
    %138 = tpu.dynamic_rotate %137 by %c64_i32_25 dim 1 : vector<4x128xf32>, i32 -> vector<4x128xf32>
    %139 = arith.mulf %137, %138 : vector<4x128xf32>
    %140 = vector.extract_strided_slice %139 {offsets = [0, 0], sizes = [4, 32], strides = [1, 1]} : vector<4x128xf32> to vector<4x32xf32>
    %141 = vector.extract_strided_slice %137 {offsets = [0, 32], sizes = [4, 32], strides = [1, 1]} : vector<4x128xf32> to vector<4x32xf32>
    %142 = arith.mulf %141, %119 : vector<4x32xf32>
    %143 = arith.addf %142, %140 : vector<4x32xf32>
    %144 = vector.extract_strided_slice %137 {offsets = [0, 96], sizes = [4, 32], strides = [1, 1]} : vector<4x128xf32> to vector<4x32xf32>
    %145 = math.tanh %143 : vector<4x32xf32>
    %146 = arith.mulf %144, %145 : vector<4x32xf32>
    %147 = vector.extract_strided_slice %146 {offsets = [0, 0], sizes = [2, 32], strides = [1, 1]} : vector<4x32xf32> to vector<2x32xf32>
    %148 = vector.extract_strided_slice %146 {offsets = [2, 0], sizes = [2, 32], strides = [1, 1]} : vector<4x32xf32> to vector<2x32xf32>
    %149 = arith.truncf %146 : vector<4x32xf32> to vector<4x32xbf16>
    %150 = tpu.concatenate %149, %149 in 1 : vector<4x32xbf16>, vector<4x32xbf16> -> vector<4x64xbf16>
    %cst_26 = arith.constant 0.000000e+00 : bf16
    %151 = vector.broadcast %cst_26 : bf16 to vector<4x64xbf16>
    %152 = arith.select %7, %150, %151 : vector<4x64xi1>, vector<4x64xbf16>
    %cst_27 = arith.constant dense<0.000000e+00> : vector<4x128xf32>
    %153 = tpu.matmul %152, %26, %cst_27 {dimension_numbers = #tpu.dot_dimension_numbers<[1], [0], [0], [1], [0, 0, 1, 1], [], []>} : vector<4x64xbf16>, vector<64x128xbf16>, vector<4x128xf32> -> vector<4x128xf32>
    %154 = arith.addf %41, %153 : vector<4x128xf32>
    %155 = arith.negf %154 : vector<4x128xf32>
    %156 = math.exp %155 : vector<4x128xf32>
    %cst_28 = arith.constant 1.000000e+00 : f32
    %157 = vector.broadcast %cst_28 : f32 to vector<4x128xf32>
    %158 = arith.addf %157, %156 : vector<4x128xf32>
    %159 = arith.divf %157, %158 : vector<4x128xf32>
    %160 = math.tanh %154 : vector<4x128xf32>
    %161 = arith.select %13, %160, %159 : vector<4x128xi1>, vector<4x128xf32>
    %c64_i32_29 = arith.constant 64 : i32
    %162 = tpu.dynamic_rotate %161 by %c64_i32_29 dim 1 : vector<4x128xf32>, i32 -> vector<4x128xf32>
    %163 = arith.mulf %161, %162 : vector<4x128xf32>
    %164 = vector.extract_strided_slice %163 {offsets = [0, 0], sizes = [4, 32], strides = [1, 1]} : vector<4x128xf32> to vector<4x32xf32>
    %165 = vector.extract_strided_slice %161 {offsets = [0, 32], sizes = [4, 32], strides = [1, 1]} : vector<4x128xf32> to vector<4x32xf32>
    %166 = arith.mulf %165, %143 : vector<4x32xf32>
    %167 = arith.addf %166, %164 : vector<4x32xf32>
    %168 = vector.extract_strided_slice %161 {offsets = [0, 96], sizes = [4, 32], strides = [1, 1]} : vector<4x128xf32> to vector<4x32xf32>
    %169 = math.tanh %167 : vector<4x32xf32>
    %170 = arith.mulf %168, %169 : vector<4x32xf32>
    %171 = vector.extract_strided_slice %170 {offsets = [0, 0], sizes = [2, 32], strides = [1, 1]} : vector<4x32xf32> to vector<2x32xf32>
    %172 = vector.extract_strided_slice %170 {offsets = [2, 0], sizes = [2, 32], strides = [1, 1]} : vector<4x32xf32> to vector<2x32xf32>
    %173 = arith.truncf %170 : vector<4x32xf32> to vector<4x32xbf16>
    %174 = tpu.concatenate %173, %173 in 1 : vector<4x32xbf16>, vector<4x32xbf16> -> vector<4x64xbf16>
    %cst_30 = arith.constant 0.000000e+00 : bf16
    %175 = vector.broadcast %cst_30 : bf16 to vector<4x64xbf16>
    %176 = arith.select %7, %174, %175 : vector<4x64xi1>, vector<4x64xbf16>
    %cst_31 = arith.constant dense<0.000000e+00> : vector<4x128xf32>
    %177 = tpu.matmul %176, %26, %cst_31 {dimension_numbers = #tpu.dot_dimension_numbers<[1], [0], [0], [1], [0, 0, 1, 1], [], []>} : vector<4x64xbf16>, vector<64x128xbf16>, vector<4x128xf32> -> vector<4x128xf32>
    %178 = arith.addf %44, %177 : vector<4x128xf32>
    %179 = arith.negf %178 : vector<4x128xf32>
    %180 = math.exp %179 : vector<4x128xf32>
    %cst_32 = arith.constant 1.000000e+00 : f32
    %181 = vector.broadcast %cst_32 : f32 to vector<4x128xf32>
    %182 = arith.addf %181, %180 : vector<4x128xf32>
    %183 = arith.divf %181, %182 : vector<4x128xf32>
    %184 = math.tanh %178 : vector<4x128xf32>
    %185 = arith.select %13, %184, %183 : vector<4x128xi1>, vector<4x128xf32>
    %c64_i32_33 = arith.constant 64 : i32
    %186 = tpu.dynamic_rotate %185 by %c64_i32_33 dim 1 : vector<4x128xf32>, i32 -> vector<4x128xf32>
    %187 = arith.mulf %185, %186 : vector<4x128xf32>
    %188 = vector.extract_strided_slice %187 {offsets = [0, 0], sizes = [4, 32], strides = [1, 1]} : vector<4x128xf32> to vector<4x32xf32>
    %189 = vector.extract_strided_slice %185 {offsets = [0, 32], sizes = [4, 32], strides = [1, 1]} : vector<4x128xf32> to vector<4x32xf32>
    %190 = arith.mulf %189, %167 : vector<4x32xf32>
    %191 = arith.addf %190, %188 : vector<4x32xf32>
    %192 = vector.extract_strided_slice %185 {offsets = [0, 96], sizes = [4, 32], strides = [1, 1]} : vector<4x128xf32> to vector<4x32xf32>
    %193 = math.tanh %191 : vector<4x32xf32>
    %194 = arith.mulf %192, %193 : vector<4x32xf32>
    %195 = vector.extract_strided_slice %194 {offsets = [0, 0], sizes = [2, 32], strides = [1, 1]} : vector<4x32xf32> to vector<2x32xf32>
    %196 = vector.extract_strided_slice %194 {offsets = [2, 0], sizes = [2, 32], strides = [1, 1]} : vector<4x32xf32> to vector<2x32xf32>
    %197 = arith.truncf %194 : vector<4x32xf32> to vector<4x32xbf16>
    %198 = tpu.concatenate %197, %197 in 1 : vector<4x32xbf16>, vector<4x32xbf16> -> vector<4x64xbf16>
    %cst_34 = arith.constant 0.000000e+00 : bf16
    %199 = vector.broadcast %cst_34 : bf16 to vector<4x64xbf16>
    %200 = arith.select %7, %198, %199 : vector<4x64xi1>, vector<4x64xbf16>
    %cst_35 = arith.constant dense<0.000000e+00> : vector<4x128xf32>
    %201 = tpu.matmul %200, %26, %cst_35 {dimension_numbers = #tpu.dot_dimension_numbers<[1], [0], [0], [1], [0, 0, 1, 1], [], []>} : vector<4x64xbf16>, vector<64x128xbf16>, vector<4x128xf32> -> vector<4x128xf32>
    %202 = arith.addf %47, %201 : vector<4x128xf32>
    %203 = arith.negf %202 : vector<4x128xf32>
    %204 = math.exp %203 : vector<4x128xf32>
    %cst_36 = arith.constant 1.000000e+00 : f32
    %205 = vector.broadcast %cst_36 : f32 to vector<4x128xf32>
    %206 = arith.addf %205, %204 : vector<4x128xf32>
    %207 = arith.divf %205, %206 : vector<4x128xf32>
    %208 = math.tanh %202 : vector<4x128xf32>
    %209 = arith.select %13, %208, %207 : vector<4x128xi1>, vector<4x128xf32>
    %c64_i32_37 = arith.constant 64 : i32
    %210 = tpu.dynamic_rotate %209 by %c64_i32_37 dim 1 : vector<4x128xf32>, i32 -> vector<4x128xf32>
    %211 = arith.mulf %209, %210 : vector<4x128xf32>
    %212 = vector.extract_strided_slice %211 {offsets = [0, 0], sizes = [4, 32], strides = [1, 1]} : vector<4x128xf32> to vector<4x32xf32>
    %213 = vector.extract_strided_slice %209 {offsets = [0, 32], sizes = [4, 32], strides = [1, 1]} : vector<4x128xf32> to vector<4x32xf32>
    %214 = arith.mulf %213, %191 : vector<4x32xf32>
    %215 = arith.addf %214, %212 : vector<4x32xf32>
    %216 = vector.extract_strided_slice %209 {offsets = [0, 96], sizes = [4, 32], strides = [1, 1]} : vector<4x128xf32> to vector<4x32xf32>
    %217 = math.tanh %215 : vector<4x32xf32>
    %218 = arith.mulf %216, %217 : vector<4x32xf32>
    %219 = vector.extract_strided_slice %218 {offsets = [0, 0], sizes = [2, 32], strides = [1, 1]} : vector<4x32xf32> to vector<2x32xf32>
    %220 = vector.extract_strided_slice %218 {offsets = [2, 0], sizes = [2, 32], strides = [1, 1]} : vector<4x32xf32> to vector<2x32xf32>
    %221 = arith.truncf %218 : vector<4x32xf32> to vector<4x32xbf16>
    %222 = tpu.concatenate %221, %221 in 1 : vector<4x32xbf16>, vector<4x32xbf16> -> vector<4x64xbf16>
    %cst_38 = arith.constant 0.000000e+00 : bf16
    %223 = vector.broadcast %cst_38 : bf16 to vector<4x64xbf16>
    %224 = arith.select %7, %222, %223 : vector<4x64xi1>, vector<4x64xbf16>
    %cst_39 = arith.constant dense<0.000000e+00> : vector<4x128xf32>
    %225 = tpu.matmul %224, %26, %cst_39 {dimension_numbers = #tpu.dot_dimension_numbers<[1], [0], [0], [1], [0, 0, 1, 1], [], []>} : vector<4x64xbf16>, vector<64x128xbf16>, vector<4x128xf32> -> vector<4x128xf32>
    %226 = arith.addf %50, %225 : vector<4x128xf32>
    %227 = arith.negf %226 : vector<4x128xf32>
    %228 = math.exp %227 : vector<4x128xf32>
    %cst_40 = arith.constant 1.000000e+00 : f32
    %229 = vector.broadcast %cst_40 : f32 to vector<4x128xf32>
    %230 = arith.addf %229, %228 : vector<4x128xf32>
    %231 = arith.divf %229, %230 : vector<4x128xf32>
    %232 = math.tanh %226 : vector<4x128xf32>
    %233 = arith.select %13, %232, %231 : vector<4x128xi1>, vector<4x128xf32>
    %c64_i32_41 = arith.constant 64 : i32
    %234 = tpu.dynamic_rotate %233 by %c64_i32_41 dim 1 : vector<4x128xf32>, i32 -> vector<4x128xf32>
    %235 = arith.mulf %233, %234 : vector<4x128xf32>
    %236 = vector.extract_strided_slice %235 {offsets = [0, 0], sizes = [4, 32], strides = [1, 1]} : vector<4x128xf32> to vector<4x32xf32>
    %237 = vector.extract_strided_slice %233 {offsets = [0, 32], sizes = [4, 32], strides = [1, 1]} : vector<4x128xf32> to vector<4x32xf32>
    %238 = arith.mulf %237, %215 : vector<4x32xf32>
    %239 = arith.addf %238, %236 : vector<4x32xf32>
    %240 = vector.extract_strided_slice %233 {offsets = [0, 96], sizes = [4, 32], strides = [1, 1]} : vector<4x128xf32> to vector<4x32xf32>
    %241 = math.tanh %239 : vector<4x32xf32>
    %242 = arith.mulf %240, %241 : vector<4x32xf32>
    %243 = vector.extract_strided_slice %242 {offsets = [0, 0], sizes = [2, 32], strides = [1, 1]} : vector<4x32xf32> to vector<2x32xf32>
    %244 = vector.extract_strided_slice %242 {offsets = [2, 0], sizes = [2, 32], strides = [1, 1]} : vector<4x32xf32> to vector<2x32xf32>
    %245 = tpu.concatenate %75, %244 in 1 : vector<2x32xf32>, vector<2x32xf32> -> vector<2x64xf32>
    %246 = tpu.concatenate %99, %220 in 1 : vector<2x32xf32>, vector<2x32xf32> -> vector<2x64xf32>
    %247 = tpu.concatenate %123, %196 in 1 : vector<2x32xf32>, vector<2x32xf32> -> vector<2x64xf32>
    %248 = tpu.concatenate %147, %172 in 1 : vector<2x32xf32>, vector<2x32xf32> -> vector<2x64xf32>
    %249 = tpu.concatenate %171, %148 in 1 : vector<2x32xf32>, vector<2x32xf32> -> vector<2x64xf32>
    %250 = tpu.concatenate %195, %124 in 1 : vector<2x32xf32>, vector<2x32xf32> -> vector<2x64xf32>
    %251 = tpu.concatenate %219, %100 in 1 : vector<2x32xf32>, vector<2x32xf32> -> vector<2x64xf32>
    %252 = tpu.concatenate %243, %76 in 1 : vector<2x32xf32>, vector<2x32xf32> -> vector<2x64xf32>
    %253 = tpu.concatenate %245, %246, %247, %248, %249, %250, %251, %252 in 0 : vector<2x64xf32>, vector<2x64xf32>, vector<2x64xf32>, vector<2x64xf32>, vector<2x64xf32>, vector<2x64xf32>, vector<2x64xf32>, vector<2x64xf32> -> vector<16x64xf32>
    %254 = arith.truncf %253 : vector<16x64xf32> to vector<16x64xbf16>
    %c0_42 = arith.constant 0 : index
    %c0_43 = arith.constant 0 : index
    %255 = vector.load %arg4[%c0_42, %c0_43] : memref<64x256xbf16, #tpu.memory_space<vmem>>, vector<64x256xbf16>
    %cst_44 = arith.constant dense<0.000000e+00> : vector<16x256xf32>
    %256 = tpu.matmul %254, %255, %cst_44 {dimension_numbers = #tpu.dot_dimension_numbers<[1], [0], [0], [1], [0, 0, 1, 1], [], []>} : vector<16x64xbf16>, vector<64x256xbf16>, vector<16x256xf32> -> vector<16x256xf32>
    %c0_45 = arith.constant 0 : index
    %c0_46 = arith.constant 0 : index
    %257 = vector.load %arg5[%c0_45, %c0_46] : memref<1x256xf32, #tpu.memory_space<vmem>>, vector<1x256xf32>
    %258 = vector.broadcast %257 : vector<1x256xf32> to vector<16x256xf32>
    %259 = arith.addf %256, %258 : vector<16x256xf32>
    %c0_47 = arith.constant 0 : index
    %c0_48 = arith.constant 0 : index
    %260 = vector.load %arg6[%c0_47, %c0_48] : memref<64x128xbf16, #tpu.memory_space<vmem>>, vector<64x128xbf16>
    %261 = vector.extract_strided_slice %259 {offsets = [0, 0], sizes = [2, 128], strides = [1, 1]} : vector<16x256xf32> to vector<2x128xf32>
    %262 = vector.extract_strided_slice %259 {offsets = [14, 128], sizes = [2, 128], strides = [1, 1]} : vector<16x256xf32> to vector<2x128xf32>
    %263 = tpu.concatenate %261, %262 in 0 : vector<2x128xf32>, vector<2x128xf32> -> vector<4x128xf32>
    %264 = vector.extract_strided_slice %259 {offsets = [2, 0], sizes = [2, 128], strides = [1, 1]} : vector<16x256xf32> to vector<2x128xf32>
    %265 = vector.extract_strided_slice %259 {offsets = [12, 128], sizes = [2, 128], strides = [1, 1]} : vector<16x256xf32> to vector<2x128xf32>
    %266 = tpu.concatenate %264, %265 in 0 : vector<2x128xf32>, vector<2x128xf32> -> vector<4x128xf32>
    %267 = vector.extract_strided_slice %259 {offsets = [4, 0], sizes = [2, 128], strides = [1, 1]} : vector<16x256xf32> to vector<2x128xf32>
    %268 = vector.extract_strided_slice %259 {offsets = [10, 128], sizes = [2, 128], strides = [1, 1]} : vector<16x256xf32> to vector<2x128xf32>
    %269 = tpu.concatenate %267, %268 in 0 : vector<2x128xf32>, vector<2x128xf32> -> vector<4x128xf32>
    %270 = vector.extract_strided_slice %259 {offsets = [6, 0], sizes = [2, 128], strides = [1, 1]} : vector<16x256xf32> to vector<2x128xf32>
    %271 = vector.extract_strided_slice %259 {offsets = [8, 128], sizes = [2, 128], strides = [1, 1]} : vector<16x256xf32> to vector<2x128xf32>
    %272 = tpu.concatenate %270, %271 in 0 : vector<2x128xf32>, vector<2x128xf32> -> vector<4x128xf32>
    %273 = vector.extract_strided_slice %259 {offsets = [8, 0], sizes = [2, 128], strides = [1, 1]} : vector<16x256xf32> to vector<2x128xf32>
    %274 = vector.extract_strided_slice %259 {offsets = [6, 128], sizes = [2, 128], strides = [1, 1]} : vector<16x256xf32> to vector<2x128xf32>
    %275 = tpu.concatenate %273, %274 in 0 : vector<2x128xf32>, vector<2x128xf32> -> vector<4x128xf32>
    %276 = vector.extract_strided_slice %259 {offsets = [10, 0], sizes = [2, 128], strides = [1, 1]} : vector<16x256xf32> to vector<2x128xf32>
    %277 = vector.extract_strided_slice %259 {offsets = [4, 128], sizes = [2, 128], strides = [1, 1]} : vector<16x256xf32> to vector<2x128xf32>
    %278 = tpu.concatenate %276, %277 in 0 : vector<2x128xf32>, vector<2x128xf32> -> vector<4x128xf32>
    %279 = vector.extract_strided_slice %259 {offsets = [12, 0], sizes = [2, 128], strides = [1, 1]} : vector<16x256xf32> to vector<2x128xf32>
    %280 = vector.extract_strided_slice %259 {offsets = [2, 128], sizes = [2, 128], strides = [1, 1]} : vector<16x256xf32> to vector<2x128xf32>
    %281 = tpu.concatenate %279, %280 in 0 : vector<2x128xf32>, vector<2x128xf32> -> vector<4x128xf32>
    %282 = vector.extract_strided_slice %259 {offsets = [14, 0], sizes = [2, 128], strides = [1, 1]} : vector<16x256xf32> to vector<2x128xf32>
    %283 = vector.extract_strided_slice %259 {offsets = [0, 128], sizes = [2, 128], strides = [1, 1]} : vector<16x256xf32> to vector<2x128xf32>
    %284 = tpu.concatenate %282, %283 in 0 : vector<2x128xf32>, vector<2x128xf32> -> vector<4x128xf32>
    %cst_49 = arith.constant 0.000000e+00 : f32
    %285 = vector.broadcast %cst_49 : f32 to vector<4x32xf32>
    %cst_50 = arith.constant 0.000000e+00 : f32
    %286 = vector.broadcast %cst_50 : f32 to vector<4x32xf32>
    %287 = arith.truncf %285 : vector<4x32xf32> to vector<4x32xbf16>
    %288 = tpu.concatenate %287, %287 in 1 : vector<4x32xbf16>, vector<4x32xbf16> -> vector<4x64xbf16>
    %cst_51 = arith.constant 0.000000e+00 : bf16
    %289 = vector.broadcast %cst_51 : bf16 to vector<4x64xbf16>
    %290 = arith.select %7, %288, %289 : vector<4x64xi1>, vector<4x64xbf16>
    %cst_52 = arith.constant dense<0.000000e+00> : vector<4x128xf32>
    %291 = tpu.matmul %290, %260, %cst_52 {dimension_numbers = #tpu.dot_dimension_numbers<[1], [0], [0], [1], [0, 0, 1, 1], [], []>} : vector<4x64xbf16>, vector<64x128xbf16>, vector<4x128xf32> -> vector<4x128xf32>
    %292 = arith.addf %263, %291 : vector<4x128xf32>
    %293 = arith.negf %292 : vector<4x128xf32>
    %294 = math.exp %293 : vector<4x128xf32>
    %cst_53 = arith.constant 1.000000e+00 : f32
    %295 = vector.broadcast %cst_53 : f32 to vector<4x128xf32>
    %296 = arith.addf %295, %294 : vector<4x128xf32>
    %297 = arith.divf %295, %296 : vector<4x128xf32>
    %298 = math.tanh %292 : vector<4x128xf32>
    %299 = arith.select %13, %298, %297 : vector<4x128xi1>, vector<4x128xf32>
    %c64_i32_54 = arith.constant 64 : i32
    %300 = tpu.dynamic_rotate %299 by %c64_i32_54 dim 1 : vector<4x128xf32>, i32 -> vector<4x128xf32>
    %301 = arith.mulf %299, %300 : vector<4x128xf32>
    %302 = vector.extract_strided_slice %301 {offsets = [0, 0], sizes = [4, 32], strides = [1, 1]} : vector<4x128xf32> to vector<4x32xf32>
    %303 = vector.extract_strided_slice %299 {offsets = [0, 32], sizes = [4, 32], strides = [1, 1]} : vector<4x128xf32> to vector<4x32xf32>
    %304 = arith.mulf %303, %286 : vector<4x32xf32>
    %305 = arith.addf %304, %302 : vector<4x32xf32>
    %306 = vector.extract_strided_slice %299 {offsets = [0, 96], sizes = [4, 32], strides = [1, 1]} : vector<4x128xf32> to vector<4x32xf32>
    %307 = math.tanh %305 : vector<4x32xf32>
    %308 = arith.mulf %306, %307 : vector<4x32xf32>
    %309 = arith.truncf %308 : vector<4x32xf32> to vector<4x32xbf16>
    %310 = tpu.concatenate %309, %309 in 1 : vector<4x32xbf16>, vector<4x32xbf16> -> vector<4x64xbf16>
    %cst_55 = arith.constant 0.000000e+00 : bf16
    %311 = vector.broadcast %cst_55 : bf16 to vector<4x64xbf16>
    %312 = arith.select %7, %310, %311 : vector<4x64xi1>, vector<4x64xbf16>
    %cst_56 = arith.constant dense<0.000000e+00> : vector<4x128xf32>
    %313 = tpu.matmul %312, %260, %cst_56 {dimension_numbers = #tpu.dot_dimension_numbers<[1], [0], [0], [1], [0, 0, 1, 1], [], []>} : vector<4x64xbf16>, vector<64x128xbf16>, vector<4x128xf32> -> vector<4x128xf32>
    %314 = arith.addf %266, %313 : vector<4x128xf32>
    %315 = arith.negf %314 : vector<4x128xf32>
    %316 = math.exp %315 : vector<4x128xf32>
    %cst_57 = arith.constant 1.000000e+00 : f32
    %317 = vector.broadcast %cst_57 : f32 to vector<4x128xf32>
    %318 = arith.addf %317, %316 : vector<4x128xf32>
    %319 = arith.divf %317, %318 : vector<4x128xf32>
    %320 = math.tanh %314 : vector<4x128xf32>
    %321 = arith.select %13, %320, %319 : vector<4x128xi1>, vector<4x128xf32>
    %c64_i32_58 = arith.constant 64 : i32
    %322 = tpu.dynamic_rotate %321 by %c64_i32_58 dim 1 : vector<4x128xf32>, i32 -> vector<4x128xf32>
    %323 = arith.mulf %321, %322 : vector<4x128xf32>
    %324 = vector.extract_strided_slice %323 {offsets = [0, 0], sizes = [4, 32], strides = [1, 1]} : vector<4x128xf32> to vector<4x32xf32>
    %325 = vector.extract_strided_slice %321 {offsets = [0, 32], sizes = [4, 32], strides = [1, 1]} : vector<4x128xf32> to vector<4x32xf32>
    %326 = arith.mulf %325, %305 : vector<4x32xf32>
    %327 = arith.addf %326, %324 : vector<4x32xf32>
    %328 = vector.extract_strided_slice %321 {offsets = [0, 96], sizes = [4, 32], strides = [1, 1]} : vector<4x128xf32> to vector<4x32xf32>
    %329 = math.tanh %327 : vector<4x32xf32>
    %330 = arith.mulf %328, %329 : vector<4x32xf32>
    %331 = arith.truncf %330 : vector<4x32xf32> to vector<4x32xbf16>
    %332 = tpu.concatenate %331, %331 in 1 : vector<4x32xbf16>, vector<4x32xbf16> -> vector<4x64xbf16>
    %cst_59 = arith.constant 0.000000e+00 : bf16
    %333 = vector.broadcast %cst_59 : bf16 to vector<4x64xbf16>
    %334 = arith.select %7, %332, %333 : vector<4x64xi1>, vector<4x64xbf16>
    %cst_60 = arith.constant dense<0.000000e+00> : vector<4x128xf32>
    %335 = tpu.matmul %334, %260, %cst_60 {dimension_numbers = #tpu.dot_dimension_numbers<[1], [0], [0], [1], [0, 0, 1, 1], [], []>} : vector<4x64xbf16>, vector<64x128xbf16>, vector<4x128xf32> -> vector<4x128xf32>
    %336 = arith.addf %269, %335 : vector<4x128xf32>
    %337 = arith.negf %336 : vector<4x128xf32>
    %338 = math.exp %337 : vector<4x128xf32>
    %cst_61 = arith.constant 1.000000e+00 : f32
    %339 = vector.broadcast %cst_61 : f32 to vector<4x128xf32>
    %340 = arith.addf %339, %338 : vector<4x128xf32>
    %341 = arith.divf %339, %340 : vector<4x128xf32>
    %342 = math.tanh %336 : vector<4x128xf32>
    %343 = arith.select %13, %342, %341 : vector<4x128xi1>, vector<4x128xf32>
    %c64_i32_62 = arith.constant 64 : i32
    %344 = tpu.dynamic_rotate %343 by %c64_i32_62 dim 1 : vector<4x128xf32>, i32 -> vector<4x128xf32>
    %345 = arith.mulf %343, %344 : vector<4x128xf32>
    %346 = vector.extract_strided_slice %345 {offsets = [0, 0], sizes = [4, 32], strides = [1, 1]} : vector<4x128xf32> to vector<4x32xf32>
    %347 = vector.extract_strided_slice %343 {offsets = [0, 32], sizes = [4, 32], strides = [1, 1]} : vector<4x128xf32> to vector<4x32xf32>
    %348 = arith.mulf %347, %327 : vector<4x32xf32>
    %349 = arith.addf %348, %346 : vector<4x32xf32>
    %350 = vector.extract_strided_slice %343 {offsets = [0, 96], sizes = [4, 32], strides = [1, 1]} : vector<4x128xf32> to vector<4x32xf32>
    %351 = math.tanh %349 : vector<4x32xf32>
    %352 = arith.mulf %350, %351 : vector<4x32xf32>
    %353 = arith.truncf %352 : vector<4x32xf32> to vector<4x32xbf16>
    %354 = tpu.concatenate %353, %353 in 1 : vector<4x32xbf16>, vector<4x32xbf16> -> vector<4x64xbf16>
    %cst_63 = arith.constant 0.000000e+00 : bf16
    %355 = vector.broadcast %cst_63 : bf16 to vector<4x64xbf16>
    %356 = arith.select %7, %354, %355 : vector<4x64xi1>, vector<4x64xbf16>
    %cst_64 = arith.constant dense<0.000000e+00> : vector<4x128xf32>
    %357 = tpu.matmul %356, %260, %cst_64 {dimension_numbers = #tpu.dot_dimension_numbers<[1], [0], [0], [1], [0, 0, 1, 1], [], []>} : vector<4x64xbf16>, vector<64x128xbf16>, vector<4x128xf32> -> vector<4x128xf32>
    %358 = arith.addf %272, %357 : vector<4x128xf32>
    %359 = arith.negf %358 : vector<4x128xf32>
    %360 = math.exp %359 : vector<4x128xf32>
    %cst_65 = arith.constant 1.000000e+00 : f32
    %361 = vector.broadcast %cst_65 : f32 to vector<4x128xf32>
    %362 = arith.addf %361, %360 : vector<4x128xf32>
    %363 = arith.divf %361, %362 : vector<4x128xf32>
    %364 = math.tanh %358 : vector<4x128xf32>
    %365 = arith.select %13, %364, %363 : vector<4x128xi1>, vector<4x128xf32>
    %c64_i32_66 = arith.constant 64 : i32
    %366 = tpu.dynamic_rotate %365 by %c64_i32_66 dim 1 : vector<4x128xf32>, i32 -> vector<4x128xf32>
    %367 = arith.mulf %365, %366 : vector<4x128xf32>
    %368 = vector.extract_strided_slice %367 {offsets = [0, 0], sizes = [4, 32], strides = [1, 1]} : vector<4x128xf32> to vector<4x32xf32>
    %369 = vector.extract_strided_slice %365 {offsets = [0, 32], sizes = [4, 32], strides = [1, 1]} : vector<4x128xf32> to vector<4x32xf32>
    %370 = arith.mulf %369, %349 : vector<4x32xf32>
    %371 = arith.addf %370, %368 : vector<4x32xf32>
    %372 = vector.extract_strided_slice %365 {offsets = [0, 96], sizes = [4, 32], strides = [1, 1]} : vector<4x128xf32> to vector<4x32xf32>
    %373 = math.tanh %371 : vector<4x32xf32>
    %374 = arith.mulf %372, %373 : vector<4x32xf32>
    %375 = arith.truncf %374 : vector<4x32xf32> to vector<4x32xbf16>
    %376 = tpu.concatenate %375, %375 in 1 : vector<4x32xbf16>, vector<4x32xbf16> -> vector<4x64xbf16>
    %cst_67 = arith.constant 0.000000e+00 : bf16
    %377 = vector.broadcast %cst_67 : bf16 to vector<4x64xbf16>
    %378 = arith.select %7, %376, %377 : vector<4x64xi1>, vector<4x64xbf16>
    %cst_68 = arith.constant dense<0.000000e+00> : vector<4x128xf32>
    %379 = tpu.matmul %378, %260, %cst_68 {dimension_numbers = #tpu.dot_dimension_numbers<[1], [0], [0], [1], [0, 0, 1, 1], [], []>} : vector<4x64xbf16>, vector<64x128xbf16>, vector<4x128xf32> -> vector<4x128xf32>
    %380 = arith.addf %275, %379 : vector<4x128xf32>
    %381 = arith.negf %380 : vector<4x128xf32>
    %382 = math.exp %381 : vector<4x128xf32>
    %cst_69 = arith.constant 1.000000e+00 : f32
    %383 = vector.broadcast %cst_69 : f32 to vector<4x128xf32>
    %384 = arith.addf %383, %382 : vector<4x128xf32>
    %385 = arith.divf %383, %384 : vector<4x128xf32>
    %386 = math.tanh %380 : vector<4x128xf32>
    %387 = arith.select %13, %386, %385 : vector<4x128xi1>, vector<4x128xf32>
    %c64_i32_70 = arith.constant 64 : i32
    %388 = tpu.dynamic_rotate %387 by %c64_i32_70 dim 1 : vector<4x128xf32>, i32 -> vector<4x128xf32>
    %389 = arith.mulf %387, %388 : vector<4x128xf32>
    %390 = vector.extract_strided_slice %389 {offsets = [0, 0], sizes = [4, 32], strides = [1, 1]} : vector<4x128xf32> to vector<4x32xf32>
    %391 = vector.extract_strided_slice %387 {offsets = [0, 32], sizes = [4, 32], strides = [1, 1]} : vector<4x128xf32> to vector<4x32xf32>
    %392 = arith.mulf %391, %371 : vector<4x32xf32>
    %393 = arith.addf %392, %390 : vector<4x32xf32>
    %394 = vector.extract_strided_slice %387 {offsets = [0, 96], sizes = [4, 32], strides = [1, 1]} : vector<4x128xf32> to vector<4x32xf32>
    %395 = math.tanh %393 : vector<4x32xf32>
    %396 = arith.mulf %394, %395 : vector<4x32xf32>
    %397 = arith.truncf %396 : vector<4x32xf32> to vector<4x32xbf16>
    %398 = tpu.concatenate %397, %397 in 1 : vector<4x32xbf16>, vector<4x32xbf16> -> vector<4x64xbf16>
    %cst_71 = arith.constant 0.000000e+00 : bf16
    %399 = vector.broadcast %cst_71 : bf16 to vector<4x64xbf16>
    %400 = arith.select %7, %398, %399 : vector<4x64xi1>, vector<4x64xbf16>
    %cst_72 = arith.constant dense<0.000000e+00> : vector<4x128xf32>
    %401 = tpu.matmul %400, %260, %cst_72 {dimension_numbers = #tpu.dot_dimension_numbers<[1], [0], [0], [1], [0, 0, 1, 1], [], []>} : vector<4x64xbf16>, vector<64x128xbf16>, vector<4x128xf32> -> vector<4x128xf32>
    %402 = arith.addf %278, %401 : vector<4x128xf32>
    %403 = arith.negf %402 : vector<4x128xf32>
    %404 = math.exp %403 : vector<4x128xf32>
    %cst_73 = arith.constant 1.000000e+00 : f32
    %405 = vector.broadcast %cst_73 : f32 to vector<4x128xf32>
    %406 = arith.addf %405, %404 : vector<4x128xf32>
    %407 = arith.divf %405, %406 : vector<4x128xf32>
    %408 = math.tanh %402 : vector<4x128xf32>
    %409 = arith.select %13, %408, %407 : vector<4x128xi1>, vector<4x128xf32>
    %c64_i32_74 = arith.constant 64 : i32
    %410 = tpu.dynamic_rotate %409 by %c64_i32_74 dim 1 : vector<4x128xf32>, i32 -> vector<4x128xf32>
    %411 = arith.mulf %409, %410 : vector<4x128xf32>
    %412 = vector.extract_strided_slice %411 {offsets = [0, 0], sizes = [4, 32], strides = [1, 1]} : vector<4x128xf32> to vector<4x32xf32>
    %413 = vector.extract_strided_slice %409 {offsets = [0, 32], sizes = [4, 32], strides = [1, 1]} : vector<4x128xf32> to vector<4x32xf32>
    %414 = arith.mulf %413, %393 : vector<4x32xf32>
    %415 = arith.addf %414, %412 : vector<4x32xf32>
    %416 = vector.extract_strided_slice %409 {offsets = [0, 96], sizes = [4, 32], strides = [1, 1]} : vector<4x128xf32> to vector<4x32xf32>
    %417 = math.tanh %415 : vector<4x32xf32>
    %418 = arith.mulf %416, %417 : vector<4x32xf32>
    %419 = arith.truncf %418 : vector<4x32xf32> to vector<4x32xbf16>
    %420 = tpu.concatenate %419, %419 in 1 : vector<4x32xbf16>, vector<4x32xbf16> -> vector<4x64xbf16>
    %cst_75 = arith.constant 0.000000e+00 : bf16
    %421 = vector.broadcast %cst_75 : bf16 to vector<4x64xbf16>
    %422 = arith.select %7, %420, %421 : vector<4x64xi1>, vector<4x64xbf16>
    %cst_76 = arith.constant dense<0.000000e+00> : vector<4x128xf32>
    %423 = tpu.matmul %422, %260, %cst_76 {dimension_numbers = #tpu.dot_dimension_numbers<[1], [0], [0], [1], [0, 0, 1, 1], [], []>} : vector<4x64xbf16>, vector<64x128xbf16>, vector<4x128xf32> -> vector<4x128xf32>
    %424 = arith.addf %281, %423 : vector<4x128xf32>
    %425 = arith.negf %424 : vector<4x128xf32>
    %426 = math.exp %425 : vector<4x128xf32>
    %cst_77 = arith.constant 1.000000e+00 : f32
    %427 = vector.broadcast %cst_77 : f32 to vector<4x128xf32>
    %428 = arith.addf %427, %426 : vector<4x128xf32>
    %429 = arith.divf %427, %428 : vector<4x128xf32>
    %430 = math.tanh %424 : vector<4x128xf32>
    %431 = arith.select %13, %430, %429 : vector<4x128xi1>, vector<4x128xf32>
    %c64_i32_78 = arith.constant 64 : i32
    %432 = tpu.dynamic_rotate %431 by %c64_i32_78 dim 1 : vector<4x128xf32>, i32 -> vector<4x128xf32>
    %433 = arith.mulf %431, %432 : vector<4x128xf32>
    %434 = vector.extract_strided_slice %433 {offsets = [0, 0], sizes = [4, 32], strides = [1, 1]} : vector<4x128xf32> to vector<4x32xf32>
    %435 = vector.extract_strided_slice %431 {offsets = [0, 32], sizes = [4, 32], strides = [1, 1]} : vector<4x128xf32> to vector<4x32xf32>
    %436 = arith.mulf %435, %415 : vector<4x32xf32>
    %437 = arith.addf %436, %434 : vector<4x32xf32>
    %438 = vector.extract_strided_slice %431 {offsets = [0, 96], sizes = [4, 32], strides = [1, 1]} : vector<4x128xf32> to vector<4x32xf32>
    %439 = math.tanh %437 : vector<4x32xf32>
    %440 = arith.mulf %438, %439 : vector<4x32xf32>
    %441 = arith.truncf %440 : vector<4x32xf32> to vector<4x32xbf16>
    %442 = tpu.concatenate %441, %441 in 1 : vector<4x32xbf16>, vector<4x32xbf16> -> vector<4x64xbf16>
    %cst_79 = arith.constant 0.000000e+00 : bf16
    %443 = vector.broadcast %cst_79 : bf16 to vector<4x64xbf16>
    %444 = arith.select %7, %442, %443 : vector<4x64xi1>, vector<4x64xbf16>
    %cst_80 = arith.constant dense<0.000000e+00> : vector<4x128xf32>
    %445 = tpu.matmul %444, %260, %cst_80 {dimension_numbers = #tpu.dot_dimension_numbers<[1], [0], [0], [1], [0, 0, 1, 1], [], []>} : vector<4x64xbf16>, vector<64x128xbf16>, vector<4x128xf32> -> vector<4x128xf32>
    %446 = arith.addf %284, %445 : vector<4x128xf32>
    %447 = arith.negf %446 : vector<4x128xf32>
    %448 = math.exp %447 : vector<4x128xf32>
    %cst_81 = arith.constant 1.000000e+00 : f32
    %449 = vector.broadcast %cst_81 : f32 to vector<4x128xf32>
    %450 = arith.addf %449, %448 : vector<4x128xf32>
    %451 = arith.divf %449, %450 : vector<4x128xf32>
    %452 = math.tanh %446 : vector<4x128xf32>
    %453 = arith.select %13, %452, %451 : vector<4x128xi1>, vector<4x128xf32>
    %c64_i32_82 = arith.constant 64 : i32
    %454 = tpu.dynamic_rotate %453 by %c64_i32_82 dim 1 : vector<4x128xf32>, i32 -> vector<4x128xf32>
    %455 = arith.mulf %453, %454 : vector<4x128xf32>
    %456 = vector.extract_strided_slice %455 {offsets = [0, 0], sizes = [4, 32], strides = [1, 1]} : vector<4x128xf32> to vector<4x32xf32>
    %457 = vector.extract_strided_slice %453 {offsets = [0, 32], sizes = [4, 32], strides = [1, 1]} : vector<4x128xf32> to vector<4x32xf32>
    %458 = arith.mulf %457, %437 : vector<4x32xf32>
    %459 = arith.addf %458, %456 : vector<4x32xf32>
    %460 = vector.extract_strided_slice %453 {offsets = [0, 96], sizes = [4, 32], strides = [1, 1]} : vector<4x128xf32> to vector<4x32xf32>
    %461 = math.tanh %459 : vector<4x32xf32>
    %462 = arith.mulf %460, %461 : vector<4x32xf32>
    %463 = vector.extract_strided_slice %462 {offsets = [0, 0], sizes = [2, 32], strides = [1, 1]} : vector<4x32xf32> to vector<2x32xf32>
    %464 = vector.extract_strided_slice %462 {offsets = [2, 0], sizes = [2, 32], strides = [1, 1]} : vector<4x32xf32> to vector<2x32xf32>
    %465 = tpu.concatenate %463, %464 in 1 : vector<2x32xf32>, vector<2x32xf32> -> vector<2x64xf32>
    %466 = arith.truncf %465 : vector<2x64xf32> to vector<2x64xbf16>
    %c0_83 = arith.constant 0 : index
    %c0_84 = arith.constant 0 : index
    %467 = vector.load %arg7[%c0_83, %c0_84] : memref<64x32xbf16, #tpu.memory_space<vmem>>, vector<64x32xbf16>
    %cst_85 = arith.constant dense<0.000000e+00> : vector<2x32xf32>
    %468 = tpu.matmul %466, %467, %cst_85 {dimension_numbers = #tpu.dot_dimension_numbers<[1], [0], [0], [1], [0, 0, 1, 1], [], []>} : vector<2x64xbf16>, vector<64x32xbf16>, vector<2x32xf32> -> vector<2x32xf32>
    %c0_86 = arith.constant 0 : index
    %c0_87 = arith.constant 0 : index
    %469 = vector.load %arg8[%c0_86, %c0_87] : memref<1x32xf32, #tpu.memory_space<vmem>>, vector<1x32xf32>
    %470 = vector.broadcast %469 : vector<1x32xf32> to vector<2x32xf32>
    %471 = arith.addf %468, %470 : vector<2x32xf32>
    %cst_88 = arith.constant 0.000000e+00 : f32
    %472 = vector.broadcast %cst_88 : f32 to vector<2x32xf32>
    %473 = arith.maximumf %471, %472 : vector<2x32xf32>
    %474 = arith.truncf %473 : vector<2x32xf32> to vector<2x32xbf16>
    %c0_89 = arith.constant 0 : index
    %c0_90 = arith.constant 0 : index
    %475 = vector.load %arg9[%c0_89, %c0_90] : memref<32x2xbf16, #tpu.memory_space<vmem>>, vector<32x2xbf16>
    %cst_91 = arith.constant dense<0.000000e+00> : vector<2x2xf32>
    %476 = tpu.matmul %474, %475, %cst_91 {dimension_numbers = #tpu.dot_dimension_numbers<[1], [0], [0], [1], [0, 0, 1, 1], [], []>} : vector<2x32xbf16>, vector<32x2xbf16>, vector<2x2xf32> -> vector<2x2xf32>
    %c0_92 = arith.constant 0 : index
    %c0_93 = arith.constant 0 : index
    %477 = vector.load %arg10[%c0_92, %c0_93] : memref<1x2xf32, #tpu.memory_space<vmem>>, vector<1x2xf32>
    %478 = vector.broadcast %477 : vector<1x2xf32> to vector<2x2xf32>
    %479 = arith.addf %476, %478 : vector<2x2xf32>
    %cst_94 = arith.constant dense<0xFF800000> : vector<2xf32>
    %480 = vector.multi_reduction <maximumf>, %479, %cst_94 [1] : vector<2x2xf32> to vector<2xf32>
    %481 = vector.shape_cast %480 : vector<2xf32> to vector<2x1xf32>
    %482 = vector.broadcast %481 : vector<2x1xf32> to vector<2x2xf32>
    %483 = arith.subf %479, %482 : vector<2x2xf32>
    %484 = math.exp %483 : vector<2x2xf32>
    %cst_95 = arith.constant dense<0.000000e+00> : vector<2xf32>
    %485 = vector.multi_reduction <add>, %484, %cst_95 [1] : vector<2x2xf32> to vector<2xf32>
    %486 = vector.shape_cast %485 : vector<2xf32> to vector<2x1xf32>
    %487 = math.log %486 : vector<2x1xf32>
    %488 = arith.addf %481, %487 : vector<2x1xf32>
    %489 = vector.broadcast %488 : vector<2x1xf32> to vector<2x2xf32>
    %490 = arith.subf %479, %489 : vector<2x2xf32>
    %c0_96 = arith.constant 0 : index
    %c0_97 = arith.constant 0 : index
    %491 = vector.load %arg11[%c0_96, %c0_97] : memref<2x2xf32, #tpu.memory_space<vmem>>, vector<2x2xf32>
    tpu.vector_store %arg11[%c0_96, %c0_97], %490 {strides = array<i32>} : memref<2x2xf32, #tpu.memory_space<vmem>>, vector<2x2xf32>,
    return
  }
}

</mosaic_0001>

<llo_original>
// kernel: forward.1
$region0: #{forward.1}
  #allocation0 [shape = 'u32[]', space=smem, size = 0x4, offset = 0x4, fixed_abs, tag = 'smem constant byte address 0x4 - core index']
  #allocation1 [shape = 'u32[144,128]{1,0:T(1,128)}', space=vmem, size = 0x12000, scoped, tag = 'internal scratch']
  %s0 = inlined_call_operand.vmem [shape: s32[16,1], index: 0, kind: input, shape index: {}]
  %s1 = inlined_call_operand.vmem [shape: bf16[64,256], index: 1, kind: input, shape index: {}]
  %s2 = inlined_call_operand.vmem [shape: f32[1,256], index: 2, kind: input, shape index: {}]
  %s3 = inlined_call_operand.vmem [shape: bf16[64,128], index: 3, kind: input, shape index: {}]
  %s4 = inlined_call_operand.hbm [shape: bf16[64,256], index: 4, kind: input, shape index: {}]
  %s5 = inlined_call_operand.vmem [shape: f32[1,256], index: 5, kind: input, shape index: {}]
  %s6 = inlined_call_operand.hbm [shape: bf16[64,128], index: 6, kind: input, shape index: {}]
  %s7 = inlined_call_operand.vmem [shape: bf16[64,32], index: 7, kind: input, shape index: {}]
  %s8 = inlined_call_operand.vmem [shape: f32[1,32], index: 8, kind: input, shape index: {}]
  %s9 = inlined_call_operand.vmem [shape: bf16[32,2], index: 9, kind: input, shape index: {}]
  %s10 = inlined_call_operand.vmem [shape: f32[1,2], index: 10, kind: input, shape index: {}]
  %s11 = inlined_call_operand.hbm [shape: f32[2,2], index: 11, kind: output, shape index: {}]
  %s12 = sld [smem:[#allocation0]]
  $region62: #{forward.1} parent=0
    _
  %s14 = ssub.s32 1, %s12
  %s15 = scalar_select 0, %s14, %s12
  $region1: #{forward.1} parent=0
    #allocation2 [shape = 'u8[32768]{0}', space=vmem, size = 0x8000, scoped, tag = 'input window, operand 4, single buffered']
    #allocation3 [shape = 's32[1]{0}', space=sflag, size = 0x4, scoped, tag = 'scoped memory for forward.1']
    #allocation4 [shape = 's32[1]{0}', space=sflag, size = 0x4, scoped, tag = 'scoped memory for forward.1']
    #allocation5 [shape = 'u8[16384]{0}', space=vmem, size = 0x4000, scoped, tag = 'input window, operand 6, single buffered']
    #allocation6 [shape = 's32[1]{0}', space=sflag, size = 0x4, scoped, tag = 'scoped memory for forward.1']
    #allocation7 [shape = 'u8[1024]{0}', space=vmem, size = 0x400, scoped, tag = 'output window, operand 0, single buffered']
    %16 = vsyncpa [#allocation3], 0
    %17 = vsyncpa [#allocation6], 0
    %18 = vsyncpa [#allocation4], 0
    // Predicated region
    $region2: #{forward.1} parent=1 // pred_check
      _
    $region3: #{forward.1} parent=1 // pred_check_branch
      %20 = sbr.rel (0) target = $region5
    $region4: #{forward.1} parent=1 // pred_region
      _
    $region5: #{forward.1} parent=1 // pred_fallthru
      _
    // Predicated region
    $region6: #{forward.1} parent=1 // pred_check
      _
    $region7: #{forward.1} parent=1 // pred_check_branch
      %22 = sbr.rel (0) target = $region9
    $region8: #{forward.1} parent=1 // pred_region
      _
    $region9: #{forward.1} parent=1 // pred_fallthru
      _
    // Predicated region
    $region10: #{forward.1} parent=1 // pred_check
      _
    $region11: #{forward.1} parent=1 // pred_check_branch
      %24 = sbr.rel (0) target = $region13
    $region12: #{forward.1} parent=1 // pred_region
      _
    $region13: #{forward.1} parent=1 // pred_fallthru
      _
    // Predicated region
    $region14: #{forward.1} parent=1 // pred_check
      _
    $region15: #{forward.1} parent=1 // pred_check_branch
      %26 = sbr.rel (0) target = $region17
    $region16: #{forward.1} parent=1 // pred_region
      _
    $region17: #{forward.1} parent=1 // pred_fallthru
      _
    // Predicated region
    $region18: #{forward.1} parent=1 // pred_check
      _
    $region19: #{forward.1} parent=1 // pred_check_branch
      %28 = sbr.rel (0) target = $region21
    $region20: #{forward.1} parent=1 // pred_region
      %s30 = ssub.s32 1024, 1024
      %31 = vsyncadd [#allocation3], %s30
      %s32 = sshll.u32 [#allocation2], 4
      %s33 = int_to_ptr.vmem [resolvable:$true] %s32
      %38 = dma.hbm_to_vmem [thread:$0]  %s4, 1024, %s33, [#allocation3], 128, 128, 8
    $region21: #{forward.1} parent=1 // pred_fallthru
      _
    // Predicated region
    $region22: #{forward.1} parent=1 // pred_check
      _
    $region23: #{forward.1} parent=1 // pred_check_branch
      %40 = sbr.rel (0) target = $region25
    $region24: #{forward.1} parent=1 // pred_region
      _
    $region25: #{forward.1} parent=1 // pred_fallthru
      _
    // Predicated region
    $region26: #{forward.1} parent=1 // pred_check
      _
    $region27: #{forward.1} parent=1 // pred_check_branch
      %42 = sbr.rel (0) target = $region29
    $region28: #{forward.1} parent=1 // pred_region
      %s44 = ssub.s32 512, 512
      %45 = vsyncadd [#allocation6], %s44
      %s46 = sshll.u32 [#allocation5], 4
      %s47 = int_to_ptr.vmem [resolvable:$true] %s46
      %52 = dma.hbm_to_vmem [thread:$0]  %s6, 512, %s47, [#allocation6], 64, 64, 4
    $region29: #{forward.1} parent=1 // pred_fallthru
      _
    // Predicated region
    $region30: #{forward.1} parent=1 // pred_check
      _
    $region31: #{forward.1} parent=1 // pred_check_branch
      %54 = sbr.rel (0) target = $region33
    $region32: #{forward.1} parent=1 // pred_region
      _
    $region33: #{forward.1} parent=1 // pred_fallthru
      _
    // Predicated region
    $region34: #{forward.1} parent=1 // pred_check
      _
    $region35: #{forward.1} parent=1 // pred_check_branch
      %56 = sbr.rel (0) target = $region37
    $region36: #{forward.1} parent=1 // pred_region
      _
    $region37: #{forward.1} parent=1 // pred_fallthru
      _
    // Predicated region
    $region38: #{forward.1} parent=1 // pred_check
      _
    $region39: #{forward.1} parent=1 // pred_check_branch
      %58 = sbr.rel (0) target = $region41
    $region40: #{forward.1} parent=1 // pred_region
      _
    $region41: #{forward.1} parent=1 // pred_fallthru
      _
    // Predicated region
    $region42: #{forward.1} parent=1 // pred_check
      _
    $region43: #{forward.1} parent=1 // pred_check_branch
      %60 = sbr.rel (0) target = $region45
    $region44: #{forward.1} parent=1 // pred_region
      _
    $region45: #{forward.1} parent=1 // pred_fallthru
      _
    // Predicated region
    $region46: #{forward.1} parent=1 // pred_check
      _
    $region47: #{forward.1} parent=1 // pred_check_branch
      %62 = sbr.rel (0) target = $region49
    $region48: #{forward.1} parent=1 // pred_region
      %63 = dma.done [#allocation3], 1024
    $region49: #{forward.1} parent=1 // pred_fallthru
      _
    // Predicated region
    $region50: #{forward.1} parent=1 // pred_check
      _
    $region51: #{forward.1} parent=1 // pred_check_branch
      %65 = sbr.rel (0) target = $region53
    $region52: #{forward.1} parent=1 // pred_region
      %66 = dma.done [#allocation6], 512
    $region53: #{forward.1} parent=1 // pred_fallthru
      _
    %v68 = vlaneseq
    %v69 = vshrl.u32 %v68, 7
    %v70 = vlaneseq
    %v71 = vand.u32 %v70, 127
    %vm72 = vcmp.lt.s32.totalorder %v69, 2
    %vm73 = vcmp.lt.s32.totalorder %v71, 32
    %vm74 = vmxor %vm72, %vm73
    %vm75 = vmxor %vm74, 1
    %vm76 = vcmp.ge.s32.totalorder %v71, 64
    %vm77 = vcmp.lt.s32.totalorder %v71, 96
    %vm78 = vmand %vm76, %vm77
    %v79 = vld [vmem:[%s0] sm:$0xff]
    %v80 = vld [vmem:[%s0 + $0x8] sm:$0xff]
    %81 = vset.pattern.permute.xlu0 0
    %82 = vperm.xlu0 %81, %v79
    %v83 = vpop.permute.xlu0 %82
    %84 = vset.pattern.permute.xlu0 0
    %85 = vperm.xlu0 %84, %v80
    %v86 = vpop.permute.xlu0 %85
    %vm87 = vcmp.eq.s32.totalorder %v71, %v83
    %vm88 = vcmp.eq.s32.totalorder %v71, %v86
    %v89 = vsel %vm87, 1, 0
    %v90 = vsel %vm88, 1, 0
    %v91 = vcvt.s32.f32 %v89
    %v92 = vcvt.s32.f32 %v90
    %v93 = vpack.c.bf16 %v92, %v91
    %v94 = vld [vmem:[%s1] sm:$0xff]
    %v95 = vld [vmem:[%s1 + $0x8] sm:$0xff]
    %v96 = vld [vmem:[%s1 + $0x10] sm:$0xff]
    %v97 = vld [vmem:[%s1 + $0x18] sm:$0xff]
    %v98 = vld [vmem:[%s1 + $0x20] sm:$0xff]
    %v99 = vld [vmem:[%s1 + $0x28] sm:$0xff]
    %v100 = vld [vmem:[%s1 + $0x30] sm:$0xff]
    %v101 = vld [vmem:[%s1 + $0x38] sm:$0xff]
    %v102 = vld [vmem:[%s2] sm:$0x3]
    %v104 = vlaneseq
    %v105 = vshrl.u32 %v104, 7
    %v106 = vsub.s32 0, %v105
    %v107 = vrot.slane %v102, %v106
    %v108 = vlaneseq
    %v109 = vshrl.u32 %v108, 7
    %v110 = vsub.s32 1, %v109
    %v111 = vrot.slane %v102, %v110
    %v122 = vunpack.c.l.b16 %v94
    %v123 = vunpack.c.h.b16 %v94
    %v124 = vunpack.c.l.b16 %v95
    %v125 = vunpack.c.h.b16 %v95
    %v126 = vunpack.c.l.b16 %v96
    %v127 = vunpack.c.h.b16 %v96
    %v128 = vunpack.c.l.b16 %v97
    %v129 = vunpack.c.h.b16 %v97
    %v130 = vunpack.c.l.b16 %v98
    %v131 = vunpack.c.h.b16 %v98
    %v132 = vunpack.c.l.b16 %v99
    %v133 = vunpack.c.h.b16 %v99
    %v134 = vunpack.c.l.b16 %v100
    %v135 = vunpack.c.h.b16 %v100
    %v136 = vunpack.c.l.b16 %v101
    %v137 = vunpack.c.h.b16 %v101
    %v138 = vpack.c.b16 %v124, %v122
    %v139 = vpack.c.b16 %v125, %v123
    %v140 = vpack.c.b16 %v128, %v126
    %v141 = vpack.c.b16 %v129, %v127
    %v142 = vpack.c.b16 %v132, %v130
    %v143 = vpack.c.b16 %v133, %v131
    %v144 = vpack.c.b16 %v136, %v134
    %v145 = vpack.c.b16 %v137, %v135
    %vm154 = vcmask 523264
    %v156 = vsel %vm154, %v93, 0
    %158 = vmatprep.subr.bf16.mxu0 %v139
    %159 = vmatpush1.bf16.msra.mxu0 %v138
    %160 = vmatprep.subr.bf16.mxu0 %v141
    %161 = vmatpush1.bf16.msra.mxu0 %v140
    %162 = vmatprep.subr.bf16.mxu0 %v143
    %163 = vmatpush1.bf16.msra.mxu0 %v142
    %164 = vmatprep.subr.bf16.mxu0 %v145
    %165 = vmatpush1.bf16.msra.mxu0 %v144
    %166 = vmatprep.subr.bf16.mxu0 0
    %167 = vmatpush1.bf16.msra.mxu0 0
    %168 = vmatprep.subr.bf16.mxu0 0
    %169 = vmatpush1.bf16.msra.mxu0 0
    %170 = vmatprep.subr.bf16.mxu0 0
    %171 = vmatpush1.bf16.msra.mxu0 0
    %172 = vmatprep.subr.bf16.mxu0 0
    %173 = vmatpush1.bf16.msra.mxu0 0
    %174 = vmatprep.subr.bf16.mxu0 0
    %175 = vmatpush1.bf16.msra.mxu0 0
    %176 = vmatprep.subr.bf16.mxu0 0
    %177 = vmatpush1.bf16.msra.mxu0 0
    %178 = vmatprep.subr.bf16.mxu0 0
    %179 = vmatpush1.bf16.msra.mxu0 0
    %180 = vmatprep.subr.bf16.mxu0 0
    %181 = vmatpush1.bf16.msra.mxu0 0
    %182 = vmatprep.subr.bf16.mxu0 0
    %183 = vmatpush1.bf16.msra.mxu0 0
    %184 = vmatprep.subr.bf16.mxu0 0
    %185 = vmatpush1.bf16.msra.mxu0 0
    %186 = vmatprep.subr.bf16.mxu0 0
    %187 = vmatpush1.bf16.msra.mxu0 0
    %188 = vmatprep.subr.bf16.mxu0 0
    %189 = vmatpush1.bf16.msra.mxu0 0
    %190 = vmatprep.mubr.bf16.mxu0 0
    %191 = vmatmul.mubr.bf16.gmra.mrb[0].mxu0 %v156
    %v192 = vpop.f32.mrb[0].mxu0
    %v193 = vadd.f32 %v107, %v192
    %v194 = vpop.f32.mrb[0].mxu0
    %v195 = vadd.f32 %v111, %v194
    %v196 = vpop.f32.mrb[0].mxu0
    %v197 = vadd.f32 %v107, %v196
    %v198 = vpop.f32.mrb[0].mxu0
    %v199 = vadd.f32 %v111, %v198
    %200 = vdwg.mxu0
    %v201 = vld [vmem:[%s3] sm:$0xf]
    %v202 = vld [vmem:[%s3 + $0x4] sm:$0xf]
    %v203 = vld [vmem:[%s3 + $0x8] sm:$0xf]
    %v204 = vld [vmem:[%s3 + $0xc] sm:$0xf]
    %v205 = vld [vmem:[%s3 + $0x10] sm:$0xf]
    %v206 = vld [vmem:[%s3 + $0x14] sm:$0xf]
    %v207 = vld [vmem:[%s3 + $0x18] sm:$0xf]
    %v208 = vld [vmem:[%s3 + $0x1c] sm:$0xf]
    %v210 = vrot.slane %v199, 4
    %vm212 = vcmask 1041408
    %v213 = vsel %vm212, %v193, %v210
    %v215 = vrot.slane %v193, 2
    %v217 = vrot.slane %v199, 2
    %v219 = vsel %vm212, %v215, %v217
    %v220 = vrot.slane %v193, 4
    %v222 = vsel %vm212, %v220, %v199
    %v223 = vrot.slane %v193, 6
    %v225 = vrot.slane %v199, 6
    %v227 = vsel %vm212, %v223, %v225
    %v229 = vrot.slane %v195, 4
    %v231 = vsel %vm212, %v197, %v229
    %v233 = vrot.slane %v197, 2
    %v235 = vrot.slane %v195, 2
    %v237 = vsel %vm212, %v233, %v235
    %v238 = vrot.slane %v197, 4
    %v240 = vsel %vm212, %v238, %v195
    %v241 = vrot.slane %v197, 6
    %v243 = vrot.slane %v195, 6
    %v245 = vsel %vm212, %v241, %v243
    %vm246 = vcmask 261120
    %vm249 = vmpackc.low %vm75, %vm75
    %v250 = vsel %vm249, 0, 0
    %v259 = vunpack.c.l.b16 %v201
    %v260 = vunpack.c.l.b16 %v202
    %v261 = vunpack.c.l.b16 %v203
    %v262 = vunpack.c.l.b16 %v204
    %v263 = vunpack.c.l.b16 %v205
    %v264 = vunpack.c.l.b16 %v206
    %v265 = vunpack.c.l.b16 %v207
    %v266 = vunpack.c.l.b16 %v208
    %v267 = vpack.c.b16 %v260, %v259
    %v268 = vpack.c.b16 %v262, %v261
    %v269 = vpack.c.b16 %v264, %v263
    %v270 = vpack.c.b16 %v266, %v265
    %v276 = vsel %vm154, %v250, 0
    %278 = vmatprep.subr.bf16.mxu0 0
    %279 = vmatpush1.bf16.msra.mxu0 %v267
    %280 = vmatprep.subr.bf16.mxu0 0
    %281 = vmatpush1.bf16.msra.mxu0 %v268
    %282 = vmatprep.subr.bf16.mxu0 0
    %283 = vmatpush1.bf16.msra.mxu0 %v269
    %284 = vmatprep.subr.bf16.mxu0 0
    %285 = vmatpush1.bf16.msra.mxu0 %v270
    %286 = vmatprep.subr.bf16.mxu0 0
    %287 = vmatpush1.bf16.msra.mxu0 0
    %288 = vmatprep.subr.bf16.mxu0 0
    %289 = vmatpush1.bf16.msra.mxu0 0
    %290 = vmatprep.subr.bf16.mxu0 0
    %291 = vmatpush1.bf16.msra.mxu0 0
    %292 = vmatprep.subr.bf16.mxu0 0
    %293 = vmatpush1.bf16.msra.mxu0 0
    %294 = vmatprep.subr.bf16.mxu0 0
    %295 = vmatpush1.bf16.msra.mxu0 0
    %296 = vmatprep.subr.bf16.mxu0 0
    %297 = vmatpush1.bf16.msra.mxu0 0
    %298 = vmatprep.subr.bf16.mxu0 0
    %299 = vmatpush1.bf16.msra.mxu0 0
    %300 = vmatprep.subr.bf16.mxu0 0
    %301 = vmatpush1.bf16.msra.mxu0 0
    %302 = vmatprep.subr.bf16.mxu0 0
    %303 = vmatpush1.bf16.msra.mxu0 0
    %304 = vmatprep.subr.bf16.mxu0 0
    %305 = vmatpush1.bf16.msra.mxu0 0
    %306 = vmatprep.subr.bf16.mxu0 0
    %307 = vmatpush1.bf16.msra.mxu0 0
    %308 = vmatprep.subr.bf16.mxu0 0
    %309 = vmatpush1.bf16.msra.mxu0 0
    %310 = vmatprep.mubr.bf16.mxu0 0
    %311 = vmatmul.mubr.bf16.gmra.mrb[0].mxu0 %v276
    %v312 = vpop.f32.mrb[0].mxu0
    %v313 = vadd.f32 0.0, %v312
    %v314 = vpop.f32.mrb[0].mxu0
    %v315 = vpop.f32.mrb[0].mxu0
    %v316 = vpop.f32.mrb[0].mxu0
    %317 = vdwg.mxu0
    %v318 = vadd.f32 %v213, %v313
    %v319 = vxor.u32 %v318, 2147483648
    %v320 = vmul.f32 %v319, 1.442695
    %v321 = vpow.pop %v320
    %v322 = vadd.f32 %v321, 1.0
    %v323 = vrcp.pop %v322
    %v324 = vmul.f32 1.0, %v323
    %v325 = vtanh.pop %v318
    %v326 = vsel %vm78, %v325, %v324
    %327 = vrot.lane.b32.xlu0 %v326, 64
    %v328 = vpop.permute.xlu0 %327
    %v329 = vmul.f32 %v326, %v328
    %v330 = vmul.f32 %v326, 0.0
    %332 = vrot.lane.b32.xlu0 %v329, 32
    %v333 = vpop.permute.xlu0 %332
    %v335 = vadd.f32 %v330, %v333
    %v336 = vtanh.pop %v335
    %338 = vrot.lane.b32.xlu0 %v336, 64
    %v339 = vpop.permute.xlu0 %338
    %v341 = vmul.f32 %v326, %v339
    %v342 = vpack.c.bf16 %v341, %v341
    %344 = vrot.lane.b32.xlu0 %v342, 32
    %v345 = vpop.permute.xlu0 %344
    %346 = vrot.lane.b32.xlu0 %v342, 64
    %v347 = vpop.permute.xlu0 %346
    %v350 = vsel %vm246, %v345, %v347
    %v352 = vsel %vm249, %v350, 0
    %v354 = vsel %vm154, %v352, 0
    %356 = vmatprep.subr.bf16.mxu0 0
    %357 = vmatpush1.bf16.msra.mxu0 %v267
    %358 = vmatprep.subr.bf16.mxu0 0
    %359 = vmatpush1.bf16.msra.mxu0 %v268
    %360 = vmatprep.subr.bf16.mxu0 0
    %361 = vmatpush1.bf16.msra.mxu0 %v269
    %362 = vmatprep.subr.bf16.mxu0 0
    %363 = vmatpush1.bf16.msra.mxu0 %v270
    %364 = vmatprep.subr.bf16.mxu0 0
    %365 = vmatpush1.bf16.msra.mxu0 0
    %366 = vmatprep.subr.bf16.mxu0 0
    %367 = vmatpush1.bf16.msra.mxu0 0
    %368 = vmatprep.subr.bf16.mxu0 0
    %369 = vmatpush1.bf16.msra.mxu0 0
    %370 = vmatprep.subr.bf16.mxu0 0
    %371 = vmatpush1.bf16.msra.mxu0 0
    %372 = vmatprep.subr.bf16.mxu0 0
    %373 = vmatpush1.bf16.msra.mxu0 0
    %374 = vmatprep.subr.bf16.mxu0 0
    %375 = vmatpush1.bf16.msra.mxu0 0
    %376 = vmatprep.subr.bf16.mxu0 0
    %377 = vmatpush1.bf16.msra.mxu0 0
    %378 = vmatprep.subr.bf16.mxu0 0
    %379 = vmatpush1.bf16.msra.mxu0 0
    %380 = vmatprep.subr.bf16.mxu0 0
    %381 = vmatpush1.bf16.msra.mxu0 0
    %382 = vmatprep.subr.bf16.mxu0 0
    %383 = vmatpush1.bf16.msra.mxu0 0
    %384 = vmatprep.subr.bf16.mxu0 0
    %385 = vmatpush1.bf16.msra.mxu0 0
    %386 = vmatprep.subr.bf16.mxu0 0
    %387 = vmatpush1.bf16.msra.mxu0 0
    %388 = vmatprep.mubr.bf16.mxu0 0
    %389 = vmatmul.mubr.bf16.gmra.mrb[0].mxu0 %v354
    %v390 = vpop.f32.mrb[0].mxu0
    %v391 = vadd.f32 0.0, %v390
    %v392 = vpop.f32.mrb[0].mxu0
    %v393 = vpop.f32.mrb[0].mxu0
    %v394 = vpop.f32.mrb[0].mxu0
    %395 = vdwg.mxu0
    %v396 = vadd.f32 %v219, %v391
    %v397 = vxor.u32 %v396, 2147483648
    %v398 = vmul.f32 %v397, 1.442695
    %v399 = vpow.pop %v398
    %v400 = vadd.f32 %v399, 1.0
    %v401 = vrcp.pop %v400
    %v402 = vmul.f32 1.0, %v401
    %v403 = vtanh.pop %v396
    %v404 = vsel %vm78, %v403, %v402
    %405 = vrot.lane.b32.xlu0 %v404, 64
    %v406 = vpop.permute.xlu0 %405
    %v407 = vmul.f32 %v404, %v406
    %v408 = vmul.f32 %v404, %v335
    %410 = vrot.lane.b32.xlu0 %v407, 32
    %v411 = vpop.permute.xlu0 %410
    %v413 = vadd.f32 %v408, %v411
    %v414 = vtanh.pop %v413
    %416 = vrot.lane.b32.xlu0 %v414, 64
    %v417 = vpop.permute.xlu0 %416
    %v419 = vmul.f32 %v404, %v417
    %v420 = vpack.c.bf16 %v419, %v419
    %422 = vrot.lane.b32.xlu0 %v420, 32
    %v423 = vpop.permute.xlu0 %422
    %424 = vrot.lane.b32.xlu0 %v420, 64
    %v425 = vpop.permute.xlu0 %424
    %v428 = vsel %vm246, %v423, %v425
    %v430 = vsel %vm249, %v428, 0
    %v432 = vsel %vm154, %v430, 0
    %434 = vmatprep.subr.bf16.mxu0 0
    %435 = vmatpush1.bf16.msra.mxu0 %v267
    %436 = vmatprep.subr.bf16.mxu0 0
    %437 = vmatpush1.bf16.msra.mxu0 %v268
    %438 = vmatprep.subr.bf16.mxu0 0
    %439 = vmatpush1.bf16.msra.mxu0 %v269
    %440 = vmatprep.subr.bf16.mxu0 0
    %441 = vmatpush1.bf16.msra.mxu0 %v270
    %442 = vmatprep.subr.bf16.mxu0 0
    %443 = vmatpush1.bf16.msra.mxu0 0
    %444 = vmatprep.subr.bf16.mxu0 0
    %445 = vmatpush1.bf16.msra.mxu0 0
    %446 = vmatprep.subr.bf16.mxu0 0
    %447 = vmatpush1.bf16.msra.mxu0 0
    %448 = vmatprep.subr.bf16.mxu0 0
    %449 = vmatpush1.bf16.msra.mxu0 0
    %450 = vmatprep.subr.bf16.mxu0 0
    %451 = vmatpush1.bf16.msra.mxu0 0
    %452 = vmatprep.subr.bf16.mxu0 0
    %453 = vmatpush1.bf16.msra.mxu0 0
    %454 = vmatprep.subr.bf16.mxu0 0
    %455 = vmatpush1.bf16.msra.mxu0 0
    %456 = vmatprep.subr.bf16.mxu0 0
    %457 = vmatpush1.bf16.msra.mxu0 0
    %458 = vmatprep.subr.bf16.mxu0 0
    %459 = vmatpush1.bf16.msra.mxu0 0
    %460 = vmatprep.subr.bf16.mxu0 0
    %461 = vmatpush1.bf16.msra.mxu0 0
    %462 = vmatprep.subr.bf16.mxu0 0
    %463 = vmatpush1.bf16.msra.mxu0 0
    %464 = vmatprep.subr.bf16.mxu0 0
    %465 = vmatpush1.bf16.msra.mxu0 0
    %466 = vmatprep.mubr.bf16.mxu0 0
    %467 = vmatmul.mubr.bf16.gmra.mrb[0].mxu0 %v432
    %v468 = vpop.f32.mrb[0].mxu0
    %v469 = vadd.f32 0.0, %v468
    %v470 = vpop.f32.mrb[0].mxu0
    %v471 = vpop.f32.mrb[0].mxu0
    %v472 = vpop.f32.mrb[0].mxu0
    %473 = vdwg.mxu0
    %v474 = vadd.f32 %v222, %v469
    %v475 = vxor.u32 %v474, 2147483648
    %v476 = vmul.f32 %v475, 1.442695
    %v477 = vpow.pop %v476
    %v478 = vadd.f32 %v477, 1.0
    %v479 = vrcp.pop %v478
    %v480 = vmul.f32 1.0, %v479
    %v481 = vtanh.pop %v474
    %v482 = vsel %vm78, %v481, %v480
    %483 = vrot.lane.b32.xlu0 %v482, 64
    %v484 = vpop.permute.xlu0 %483
    %v485 = vmul.f32 %v482, %v484
    %v486 = vmul.f32 %v482, %v413
    %488 = vrot.lane.b32.xlu0 %v485, 32
    %v489 = vpop.permute.xlu0 %488
    %v491 = vadd.f32 %v486, %v489
    %v492 = vtanh.pop %v491
    %494 = vrot.lane.b32.xlu0 %v492, 64
    %v495 = vpop.permute.xlu0 %494
    %v497 = vmul.f32 %v482, %v495
    %v498 = vpack.c.bf16 %v497, %v497
    %500 = vrot.lane.b32.xlu0 %v498, 32
    %v501 = vpop.permute.xlu0 %500
    %502 = vrot.lane.b32.xlu0 %v498, 64
    %v503 = vpop.permute.xlu0 %502
    %v506 = vsel %vm246, %v501, %v503
    %v508 = vsel %vm249, %v506, 0
    %v510 = vsel %vm154, %v508, 0
    %512 = vmatprep.subr.bf16.mxu0 0
    %513 = vmatpush1.bf16.msra.mxu0 %v267
    %514 = vmatprep.subr.bf16.mxu0 0
    %515 = vmatpush1.bf16.msra.mxu0 %v268
    %516 = vmatprep.subr.bf16.mxu0 0
    %517 = vmatpush1.bf16.msra.mxu0 %v269
    %518 = vmatprep.subr.bf16.mxu0 0
    %519 = vmatpush1.bf16.msra.mxu0 %v270
    %520 = vmatprep.subr.bf16.mxu0 0
    %521 = vmatpush1.bf16.msra.mxu0 0
    %522 = vmatprep.subr.bf16.mxu0 0
    %523 = vmatpush1.bf16.msra.mxu0 0
    %524 = vmatprep.subr.bf16.mxu0 0
    %525 = vmatpush1.bf16.msra.mxu0 0
    %526 = vmatprep.subr.bf16.mxu0 0
    %527 = vmatpush1.bf16.msra.mxu0 0
    %528 = vmatprep.subr.bf16.mxu0 0
    %529 = vmatpush1.bf16.msra.mxu0 0
    %530 = vmatprep.subr.bf16.mxu0 0
    %531 = vmatpush1.bf16.msra.mxu0 0
    %532 = vmatprep.subr.bf16.mxu0 0
    %533 = vmatpush1.bf16.msra.mxu0 0
    %534 = vmatprep.subr.bf16.mxu0 0
    %535 = vmatpush1.bf16.msra.mxu0 0
    %536 = vmatprep.subr.bf16.mxu0 0
    %537 = vmatpush1.bf16.msra.mxu0 0
    %538 = vmatprep.subr.bf16.mxu0 0
    %539 = vmatpush1.bf16.msra.mxu0 0
    %540 = vmatprep.subr.bf16.mxu0 0
    %541 = vmatpush1.bf16.msra.mxu0 0
    %542 = vmatprep.subr.bf16.mxu0 0
    %543 = vmatpush1.bf16.msra.mxu0 0
    %544 = vmatprep.mubr.bf16.mxu0 0
    %545 = vmatmul.mubr.bf16.gmra.mrb[0].mxu0 %v510
    %v546 = vpop.f32.mrb[0].mxu0
    %v547 = vadd.f32 0.0, %v546
    %v548 = vpop.f32.mrb[0].mxu0
    %v549 = vpop.f32.mrb[0].mxu0
    %v550 = vpop.f32.mrb[0].mxu0
    %551 = vdwg.mxu0
    %v552 = vadd.f32 %v227, %v547
    %v553 = vxor.u32 %v552, 2147483648
    %v554 = vmul.f32 %v553, 1.442695
    %v555 = vpow.pop %v554
    %v556 = vadd.f32 %v555, 1.0
    %v557 = vrcp.pop %v556
    %v558 = vmul.f32 1.0, %v557
    %v559 = vtanh.pop %v552
    %v560 = vsel %vm78, %v559, %v558
    %561 = vrot.lane.b32.xlu0 %v560, 64
    %v562 = vpop.permute.xlu0 %561
    %v563 = vmul.f32 %v560, %v562
    %v564 = vmul.f32 %v560, %v491
    %566 = vrot.lane.b32.xlu0 %v563, 32
    %v567 = vpop.permute.xlu0 %566
    %v569 = vadd.f32 %v564, %v567
    %v570 = vtanh.pop %v569
    %572 = vrot.lane.b32.xlu0 %v570, 64
    %v573 = vpop.permute.xlu0 %572
    %v575 = vmul.f32 %v560, %v573
    %v576 = vpack.c.bf16 %v575, %v575
    %578 = vrot.lane.b32.xlu0 %v576, 32
    %v579 = vpop.permute.xlu0 %578
    %580 = vrot.lane.b32.xlu0 %v576, 64
    %v581 = vpop.permute.xlu0 %580
    %v584 = vsel %vm246, %v579, %v581
    %v586 = vsel %vm249, %v584, 0
    %v588 = vsel %vm154, %v586, 0
    %590 = vmatprep.subr.bf16.mxu0 0
    %591 = vmatpush1.bf16.msra.mxu0 %v267
    %592 = vmatprep.subr.bf16.mxu0 0
    %593 = vmatpush1.bf16.msra.mxu0 %v268
    %594 = vmatprep.subr.bf16.mxu0 0
    %595 = vmatpush1.bf16.msra.mxu0 %v269
    %596 = vmatprep.subr.bf16.mxu0 0
    %597 = vmatpush1.bf16.msra.mxu0 %v270
    %598 = vmatprep.subr.bf16.mxu0 0
    %599 = vmatpush1.bf16.msra.mxu0 0
    %600 = vmatprep.subr.bf16.mxu0 0
    %601 = vmatpush1.bf16.msra.mxu0 0
    %602 = vmatprep.subr.bf16.mxu0 0
    %603 = vmatpush1.bf16.msra.mxu0 0
    %604 = vmatprep.subr.bf16.mxu0 0
    %605 = vmatpush1.bf16.msra.mxu0 0
    %606 = vmatprep.subr.bf16.mxu0 0
    %607 = vmatpush1.bf16.msra.mxu0 0
    %608 = vmatprep.subr.bf16.mxu0 0
    %609 = vmatpush1.bf16.msra.mxu0 0
    %610 = vmatprep.subr.bf16.mxu0 0
    %611 = vmatpush1.bf16.msra.mxu0 0
    %612 = vmatprep.subr.bf16.mxu0 0
    %613 = vmatpush1.bf16.msra.mxu0 0
    %614 = vmatprep.subr.bf16.mxu0 0
    %615 = vmatpush1.bf16.msra.mxu0 0
    %616 = vmatprep.subr.bf16.mxu0 0
    %617 = vmatpush1.bf16.msra.mxu0 0
    %618 = vmatprep.subr.bf16.mxu0 0
    %619 = vmatpush1.bf16.msra.mxu0 0
    %620 = vmatprep.subr.bf16.mxu0 0
    %621 = vmatpush1.bf16.msra.mxu0 0
    %622 = vmatprep.mubr.bf16.mxu0 0
    %623 = vmatmul.mubr.bf16.gmra.mrb[0].mxu0 %v588
    %v624 = vpop.f32.mrb[0].mxu0
    %v625 = vadd.f32 0.0, %v624
    %v626 = vpop.f32.mrb[0].mxu0
    %v627 = vpop.f32.mrb[0].mxu0
    %v628 = vpop.f32.mrb[0].mxu0
    %629 = vdwg.mxu0
    %v630 = vadd.f32 %v231, %v625
    %v631 = vxor.u32 %v630, 2147483648
    %v632 = vmul.f32 %v631, 1.442695
    %v633 = vpow.pop %v632
    %v634 = vadd.f32 %v633, 1.0
    %v635 = vrcp.pop %v634
    %v636 = vmul.f32 1.0, %v635
    %v637 = vtanh.pop %v630
    %v638 = vsel %vm78, %v637, %v636
    %639 = vrot.lane.b32.xlu0 %v638, 64
    %v640 = vpop.permute.xlu0 %639
    %v641 = vmul.f32 %v638, %v640
    %v642 = vmul.f32 %v638, %v569
    %644 = vrot.lane.b32.xlu0 %v641, 32
    %v645 = vpop.permute.xlu0 %644
    %v647 = vadd.f32 %v642, %v645
    %v648 = vtanh.pop %v647
    %650 = vrot.lane.b32.xlu0 %v648, 64
    %v651 = vpop.permute.xlu0 %650
    %v653 = vmul.f32 %v638, %v651
    %v654 = vpack.c.bf16 %v653, %v653
    %656 = vrot.lane.b32.xlu0 %v654, 32
    %v657 = vpop.permute.xlu0 %656
    %658 = vrot.lane.b32.xlu0 %v654, 64
    %v659 = vpop.permute.xlu0 %658
    %v662 = vsel %vm246, %v657, %v659
    %v664 = vsel %vm249, %v662, 0
    %v666 = vsel %vm154, %v664, 0
    %668 = vmatprep.subr.bf16.mxu0 0
    %669 = vmatpush1.bf16.msra.mxu0 %v267
    %670 = vmatprep.subr.bf16.mxu0 0
    %671 = vmatpush1.bf16.msra.mxu0 %v268
    %672 = vmatprep.subr.bf16.mxu0 0
    %673 = vmatpush1.bf16.msra.mxu0 %v269
    %674 = vmatprep.subr.bf16.mxu0 0
    %675 = vmatpush1.bf16.msra.mxu0 %v270
    %676 = vmatprep.subr.bf16.mxu0 0
    %677 = vmatpush1.bf16.msra.mxu0 0
    %678 = vmatprep.subr.bf16.mxu0 0
    %679 = vmatpush1.bf16.msra.mxu0 0
    %680 = vmatprep.subr.bf16.mxu0 0
    %681 = vmatpush1.bf16.msra.mxu0 0
    %682 = vmatprep.subr.bf16.mxu0 0
    %683 = vmatpush1.bf16.msra.mxu0 0
    %684 = vmatprep.subr.bf16.mxu0 0
    %685 = vmatpush1.bf16.msra.mxu0 0
    %686 = vmatprep.subr.bf16.mxu0 0
    %687 = vmatpush1.bf16.msra.mxu0 0
    %688 = vmatprep.subr.bf16.mxu0 0
    %689 = vmatpush1.bf16.msra.mxu0 0
    %690 = vmatprep.subr.bf16.mxu0 0
    %691 = vmatpush1.bf16.msra.mxu0 0
    %692 = vmatprep.subr.bf16.mxu0 0
    %693 = vmatpush1.bf16.msra.mxu0 0
    %694 = vmatprep.subr.bf16.mxu0 0
    %695 = vmatpush1.bf16.msra.mxu0 0
    %696 = vmatprep.subr.bf16.mxu0 0
    %697 = vmatpush1.bf16.msra.mxu0 0
    %698 = vmatprep.subr.bf16.mxu0 0
    %699 = vmatpush1.bf16.msra.mxu0 0
    %700 = vmatprep.mubr.bf16.mxu0 0
    %701 = vmatmul.mubr.bf16.gmra.mrb[0].mxu0 %v666
    %v702 = vpop.f32.mrb[0].mxu0
    %v703 = vadd.f32 0.0, %v702
    %v704 = vpop.f32.mrb[0].mxu0
    %v705 = vpop.f32.mrb[0].mxu0
    %v706 = vpop.f32.mrb[0].mxu0
    %707 = vdwg.mxu0
    %v708 = vadd.f32 %v237, %v703
    %v709 = vxor.u32 %v708, 2147483648
    %v710 = vmul.f32 %v709, 1.442695
    %v711 = vpow.pop %v710
    %v712 = vadd.f32 %v711, 1.0
    %v713 = vrcp.pop %v712
    %v714 = vmul.f32 1.0, %v713
    %v715 = vtanh.pop %v708
    %v716 = vsel %vm78, %v715, %v714
    %717 = vrot.lane.b32.xlu0 %v716, 64
    %v718 = vpop.permute.xlu0 %717
    %v719 = vmul.f32 %v716, %v718
    %v720 = vmul.f32 %v716, %v647
    %722 = vrot.lane.b32.xlu0 %v719, 32
    %v723 = vpop.permute.xlu0 %722
    %v725 = vadd.f32 %v720, %v723
    %v726 = vtanh.pop %v725
    %728 = vrot.lane.b32.xlu0 %v726, 64
    %v729 = vpop.permute.xlu0 %728
    %v731 = vmul.f32 %v716, %v729
    %v732 = vpack.c.bf16 %v731, %v731
    %734 = vrot.lane.b32.xlu0 %v732, 32
    %v735 = vpop.permute.xlu0 %734
    %736 = vrot.lane.b32.xlu0 %v732, 64
    %v737 = vpop.permute.xlu0 %736
    %v740 = vsel %vm246, %v735, %v737
    %v742 = vsel %vm249, %v740, 0
    %v744 = vsel %vm154, %v742, 0
    %746 = vmatprep.subr.bf16.mxu0 0
    %747 = vmatpush1.bf16.msra.mxu0 %v267
    %748 = vmatprep.subr.bf16.mxu0 0
    %749 = vmatpush1.bf16.msra.mxu0 %v268
    %750 = vmatprep.subr.bf16.mxu0 0
    %751 = vmatpush1.bf16.msra.mxu0 %v269
    %752 = vmatprep.subr.bf16.mxu0 0
    %753 = vmatpush1.bf16.msra.mxu0 %v270
    %754 = vmatprep.subr.bf16.mxu0 0
    %755 = vmatpush1.bf16.msra.mxu0 0
    %756 = vmatprep.subr.bf16.mxu0 0
    %757 = vmatpush1.bf16.msra.mxu0 0
    %758 = vmatprep.subr.bf16.mxu0 0
    %759 = vmatpush1.bf16.msra.mxu0 0
    %760 = vmatprep.subr.bf16.mxu0 0
    %761 = vmatpush1.bf16.msra.mxu0 0
    %762 = vmatprep.subr.bf16.mxu0 0
    %763 = vmatpush1.bf16.msra.mxu0 0
    %764 = vmatprep.subr.bf16.mxu0 0
    %765 = vmatpush1.bf16.msra.mxu0 0
    %766 = vmatprep.subr.bf16.mxu0 0
    %767 = vmatpush1.bf16.msra.mxu0 0
    %768 = vmatprep.subr.bf16.mxu0 0
    %769 = vmatpush1.bf16.msra.mxu0 0
    %770 = vmatprep.subr.bf16.mxu0 0
    %771 = vmatpush1.bf16.msra.mxu0 0
    %772 = vmatprep.subr.bf16.mxu0 0
    %773 = vmatpush1.bf16.msra.mxu0 0
    %774 = vmatprep.subr.bf16.mxu0 0
    %775 = vmatpush1.bf16.msra.mxu0 0
    %776 = vmatprep.subr.bf16.mxu0 0
    %777 = vmatpush1.bf16.msra.mxu0 0
    %778 = vmatprep.mubr.bf16.mxu0 0
    %779 = vmatmul.mubr.bf16.gmra.mrb[0].mxu0 %v744
    %v780 = vpop.f32.mrb[0].mxu0
    %v781 = vadd.f32 0.0, %v780
    %v782 = vpop.f32.mrb[0].mxu0
    %v783 = vpop.f32.mrb[0].mxu0
    %v784 = vpop.f32.mrb[0].mxu0
    %785 = vdwg.mxu0
    %v786 = vadd.f32 %v240, %v781
    %v787 = vxor.u32 %v786, 2147483648
    %v788 = vmul.f32 %v787, 1.442695
    %v789 = vpow.pop %v788
    %v790 = vadd.f32 %v789, 1.0
    %v791 = vrcp.pop %v790
    %v792 = vmul.f32 1.0, %v791
    %v793 = vtanh.pop %v786
    %v794 = vsel %vm78, %v793, %v792
    %795 = vrot.lane.b32.xlu0 %v794, 64
    %v796 = vpop.permute.xlu0 %795
    %v797 = vmul.f32 %v794, %v796
    %v798 = vmul.f32 %v794, %v725
    %800 = vrot.lane.b32.xlu0 %v797, 32
    %v801 = vpop.permute.xlu0 %800
    %v803 = vadd.f32 %v798, %v801
    %v804 = vtanh.pop %v803
    %806 = vrot.lane.b32.xlu0 %v804, 64
    %v807 = vpop.permute.xlu0 %806
    %v809 = vmul.f32 %v794, %v807
    %v810 = vpack.c.bf16 %v809, %v809
    %812 = vrot.lane.b32.xlu0 %v810, 32
    %v813 = vpop.permute.xlu0 %812
    %814 = vrot.lane.b32.xlu0 %v810, 64
    %v815 = vpop.permute.xlu0 %814
    %v818 = vsel %vm246, %v813, %v815
    %v820 = vsel %vm249, %v818, 0
    %v822 = vsel %vm154, %v820, 0
    %824 = vmatprep.subr.bf16.mxu0 0
    %825 = vmatpush1.bf16.msra.mxu0 %v267
    %826 = vmatprep.subr.bf16.mxu0 0
    %827 = vmatpush1.bf16.msra.mxu0 %v268
    %828 = vmatprep.subr.bf16.mxu0 0
    %829 = vmatpush1.bf16.msra.mxu0 %v269
    %830 = vmatprep.subr.bf16.mxu0 0
    %831 = vmatpush1.bf16.msra.mxu0 %v270
    %832 = vmatprep.subr.bf16.mxu0 0
    %833 = vmatpush1.bf16.msra.mxu0 0
    %834 = vmatprep.subr.bf16.mxu0 0
    %835 = vmatpush1.bf16.msra.mxu0 0
    %836 = vmatprep.subr.bf16.mxu0 0
    %837 = vmatpush1.bf16.msra.mxu0 0
    %838 = vmatprep.subr.bf16.mxu0 0
    %839 = vmatpush1.bf16.msra.mxu0 0
    %840 = vmatprep.subr.bf16.mxu0 0
    %841 = vmatpush1.bf16.msra.mxu0 0
    %842 = vmatprep.subr.bf16.mxu0 0
    %843 = vmatpush1.bf16.msra.mxu0 0
    %844 = vmatprep.subr.bf16.mxu0 0
    %845 = vmatpush1.bf16.msra.mxu0 0
    %846 = vmatprep.subr.bf16.mxu0 0
    %847 = vmatpush1.bf16.msra.mxu0 0
    %848 = vmatprep.subr.bf16.mxu0 0
    %849 = vmatpush1.bf16.msra.mxu0 0
    %850 = vmatprep.subr.bf16.mxu0 0
    %851 = vmatpush1.bf16.msra.mxu0 0
    %852 = vmatprep.subr.bf16.mxu0 0
    %853 = vmatpush1.bf16.msra.mxu0 0
    %854 = vmatprep.subr.bf16.mxu0 0
    %855 = vmatpush1.bf16.msra.mxu0 0
    %856 = vmatprep.mubr.bf16.mxu0 0
    %857 = vmatmul.mubr.bf16.gmra.mrb[0].mxu0 %v822
    %v858 = vpop.f32.mrb[0].mxu0
    %v859 = vadd.f32 0.0, %v858
    %v860 = vpop.f32.mrb[0].mxu0
    %v861 = vpop.f32.mrb[0].mxu0
    %v862 = vpop.f32.mrb[0].mxu0
    %863 = vdwg.mxu0
    %v864 = vadd.f32 %v245, %v859
    %v865 = vxor.u32 %v864, 2147483648
    %v866 = vmul.f32 %v865, 1.442695
    %v867 = vpow.pop %v866
    %v868 = vadd.f32 %v867, 1.0
    %v869 = vrcp.pop %v868
    %v870 = vmul.f32 1.0, %v869
    %v871 = vtanh.pop %v864
    %v872 = vsel %vm78, %v871, %v870
    %873 = vrot.lane.b32.xlu0 %v872, 64
    %v874 = vpop.permute.xlu0 %873
    %v875 = vmul.f32 %v872, %v874
    %v876 = vmul.f32 %v872, %v803
    %878 = vrot.lane.b32.xlu0 %v875, 32
    %v879 = vpop.permute.xlu0 %878
    %v881 = vadd.f32 %v876, %v879
    %v882 = vtanh.pop %v881
    %884 = vrot.lane.b32.xlu0 %v882, 64
    %v885 = vpop.permute.xlu0 %884
    %v887 = vmul.f32 %v872, %v885
    %889 = vrot.lane.b32.xlu0 %v341, 32
    %v890 = vpop.permute.xlu0 %889
    %v893 = vrot.slane %v887, 2
    %894 = vrot.lane.b32.xlu0 %v893, 64
    %v895 = vpop.permute.xlu0 %894
    %v897 = vsel %vm246, %v890, %v895
    %899 = vrot.lane.b32.xlu0 %v419, 32
    %v900 = vpop.permute.xlu0 %899
    %v903 = vrot.slane %v809, 2
    %904 = vrot.lane.b32.xlu0 %v903, 64
    %v905 = vpop.permute.xlu0 %904
    %v907 = vsel %vm246, %v900, %v905
    %909 = vrot.lane.b32.xlu0 %v497, 32
    %v910 = vpop.permute.xlu0 %909
    %v913 = vrot.slane %v731, 2
    %914 = vrot.lane.b32.xlu0 %v913, 64
    %v915 = vpop.permute.xlu0 %914
    %v917 = vsel %vm246, %v910, %v915
    %919 = vrot.lane.b32.xlu0 %v575, 32
    %v920 = vpop.permute.xlu0 %919
    %v923 = vrot.slane %v653, 2
    %924 = vrot.lane.b32.xlu0 %v923, 64
    %v925 = vpop.permute.xlu0 %924
    %v927 = vsel %vm246, %v920, %v925
    %928 = vrot.lane.b32.xlu0 %v653, 32
    %v929 = vpop.permute.xlu0 %928
    %v931 = vrot.slane %v575, 2
    %932 = vrot.lane.b32.xlu0 %v931, 64
    %v933 = vpop.permute.xlu0 %932
    %v935 = vsel %vm246, %v929, %v933
    %936 = vrot.lane.b32.xlu0 %v731, 32
    %v937 = vpop.permute.xlu0 %936
    %v939 = vrot.slane %v497, 2
    %940 = vrot.lane.b32.xlu0 %v939, 64
    %v941 = vpop.permute.xlu0 %940
    %v943 = vsel %vm246, %v937, %v941
    %944 = vrot.lane.b32.xlu0 %v809, 32
    %v945 = vpop.permute.xlu0 %944
    %v947 = vrot.slane %v419, 2
    %948 = vrot.lane.b32.xlu0 %v947, 64
    %v949 = vpop.permute.xlu0 %948
    %v951 = vsel %vm246, %v945, %v949
    %952 = vrot.lane.b32.xlu0 %v887, 32
    %v953 = vpop.permute.xlu0 %952
    %v955 = vrot.slane %v341, 2
    %956 = vrot.lane.b32.xlu0 %v955, 64
    %v957 = vpop.permute.xlu0 %956
    %v959 = vsel %vm246, %v953, %v957
    %v961 = vrot.slane %v907, 6
    %v964 = vrot.slane %v917, 4
    %v967 = vrot.slane %v927, 2
    %v970 = vrot.slane %v943, 6
    %v973 = vrot.slane %v951, 4
    %v976 = vrot.slane %v959, 2
    %v978 = vsel %vm212, %v897, %v961
    %vm979 = vcmask 1043456
    %v980 = vsel %vm979, %v978, %v964
    %vm981 = vcmask 1045504
    %v982 = vsel %vm981, %v980, %v967
    %v983 = vsel %vm212, %v935, %v970
    %v984 = vsel %vm979, %v983, %v973
    %v985 = vsel %vm981, %v984, %v976
    %v986 = vpack.c.bf16 %v985, %v982
    %v987 = vld [vmem:[#allocation2] sm:$0xff]
    %v988 = vld [vmem:[#allocation2 + $0x8] sm:$0xff]
    %v989 = vld [vmem:[#allocation2 + $0x10] sm:$0xff]
    %v990 = vld [vmem:[#allocation2 + $0x18] sm:$0xff]
    %v991 = vld [vmem:[#allocation2 + $0x20] sm:$0xff]
    %v992 = vld [vmem:[#allocation2 + $0x28] sm:$0xff]
    %v993 = vld [vmem:[#allocation2 + $0x30] sm:$0xff]
    %v994 = vld [vmem:[#allocation2 + $0x38] sm:$0xff]
    %v995 = vld [vmem:[%s5] sm:$0x3]
    %v997 = vlaneseq
    %v998 = vshrl.u32 %v997, 7
    %v999 = vsub.s32 0, %v998
    %v1000 = vrot.slane %v995, %v999
    %v1001 = vlaneseq
    %v1002 = vshrl.u32 %v1001, 7
    %v1003 = vsub.s32 1, %v1002
    %v1004 = vrot.slane %v995, %v1003
    %v1015 = vunpack.c.l.b16 %v987
    %v1016 = vunpack.c.h.b16 %v987
    %v1017 = vunpack.c.l.b16 %v988
    %v1018 = vunpack.c.h.b16 %v988
    %v1019 = vunpack.c.l.b16 %v989
    %v1020 = vunpack.c.h.b16 %v989
    %v1021 = vunpack.c.l.b16 %v990
    %v1022 = vunpack.c.h.b16 %v990
    %v1023 = vunpack.c.l.b16 %v991
    %v1024 = vunpack.c.h.b16 %v991
    %v1025 = vunpack.c.l.b16 %v992
    %v1026 = vunpack.c.h.b16 %v992
    %v1027 = vunpack.c.l.b16 %v993
    %v1028 = vunpack.c.h.b16 %v993
    %v1029 = vunpack.c.l.b16 %v994
    %v1030 = vunpack.c.h.b16 %v994
    %v1031 = vpack.c.b16 %v1017, %v1015
    %v1032 = vpack.c.b16 %v1018, %v1016
    %v1033 = vpack.c.b16 %v1021, %v1019
    %v1034 = vpack.c.b16 %v1022, %v1020
    %v1035 = vpack.c.b16 %v1025, %v1023
    %v1036 = vpack.c.b16 %v1026, %v1024
    %v1037 = vpack.c.b16 %v1029, %v1027
    %v1038 = vpack.c.b16 %v1030, %v1028
    %v1048 = vsel %vm154, %v986, 0
    %1050 = vmatprep.subr.bf16.mxu0 %v1032
    %1051 = vmatpush1.bf16.msra.mxu0 %v1031
    %1052 = vmatprep.subr.bf16.mxu0 %v1034
    %1053 = vmatpush1.bf16.msra.mxu0 %v1033
    %1054 = vmatprep.subr.bf16.mxu0 %v1036
    %1055 = vmatpush1.bf16.msra.mxu0 %v1035
    %1056 = vmatprep.subr.bf16.mxu0 %v1038
    %1057 = vmatpush1.bf16.msra.mxu0 %v1037
    %1058 = vmatprep.subr.bf16.mxu0 0
    %1059 = vmatpush1.bf16.msra.mxu0 0
    %1060 = vmatprep.subr.bf16.mxu0 0
    %1061 = vmatpush1.bf16.msra.mxu0 0
    %1062 = vmatprep.subr.bf16.mxu0 0
    %1063 = vmatpush1.bf16.msra.mxu0 0
    %1064 = vmatprep.subr.bf16.mxu0 0
    %1065 = vmatpush1.bf16.msra.mxu0 0
    %1066 = vmatprep.subr.bf16.mxu0 0
    %1067 = vmatpush1.bf16.msra.mxu0 0
    %1068 = vmatprep.subr.bf16.mxu0 0
    %1069 = vmatpush1.bf16.msra.mxu0 0
    %1070 = vmatprep.subr.bf16.mxu0 0
    %1071 = vmatpush1.bf16.msra.mxu0 0
    %1072 = vmatprep.subr.bf16.mxu0 0
    %1073 = vmatpush1.bf16.msra.mxu0 0
    %1074 = vmatprep.subr.bf16.mxu0 0
    %1075 = vmatpush1.bf16.msra.mxu0 0
    %1076 = vmatprep.subr.bf16.mxu0 0
    %1077 = vmatpush1.bf16.msra.mxu0 0
    %1078 = vmatprep.subr.bf16.mxu0 0
    %1079 = vmatpush1.bf16.msra.mxu0 0
    %1080 = vmatprep.subr.bf16.mxu0 0
    %1081 = vmatpush1.bf16.msra.mxu0 0
    %1082 = vmatprep.mubr.bf16.mxu0 0
    %1083 = vmatmul.mubr.bf16.gmra.mrb[0].mxu0 %v1048
    %v1084 = vpop.f32.mrb[0].mxu0
    %v1085 = vadd.f32 %v1000, %v1084
    %v1086 = vpop.f32.mrb[0].mxu0
    %v1087 = vadd.f32 %v1004, %v1086
    %v1088 = vpop.f32.mrb[0].mxu0
    %v1089 = vadd.f32 %v1000, %v1088
    %v1090 = vpop.f32.mrb[0].mxu0
    %v1091 = vadd.f32 %v1004, %v1090
    %1092 = vdwg.mxu0
    %v1093 = vld [vmem:[#allocation5] sm:$0xf]
    %v1094 = vld [vmem:[#allocation5 + $0x4] sm:$0xf]
    %v1095 = vld [vmem:[#allocation5 + $0x8] sm:$0xf]
    %v1096 = vld [vmem:[#allocation5 + $0xc] sm:$0xf]
    %v1097 = vld [vmem:[#allocation5 + $0x10] sm:$0xf]
    %v1098 = vld [vmem:[#allocation5 + $0x14] sm:$0xf]
    %v1099 = vld [vmem:[#allocation5 + $0x18] sm:$0xf]
    %v1100 = vld [vmem:[#allocation5 + $0x1c] sm:$0xf]
    %v1102 = vrot.slane %v1091, 4
    %v1104 = vsel %vm212, %v1085, %v1102
    %v1106 = vrot.slane %v1085, 2
    %v1108 = vrot.slane %v1091, 2
    %v1110 = vsel %vm212, %v1106, %v1108
    %v1111 = vrot.slane %v1085, 4
    %v1113 = vsel %vm212, %v1111, %v1091
    %v1114 = vrot.slane %v1085, 6
    %v1116 = vrot.slane %v1091, 6
    %v1118 = vsel %vm212, %v1114, %v1116
    %v1120 = vrot.slane %v1087, 4
    %v1122 = vsel %vm212, %v1089, %v1120
    %v1124 = vrot.slane %v1089, 2
    %v1126 = vrot.slane %v1087, 2
    %v1128 = vsel %vm212, %v1124, %v1126
    %v1129 = vrot.slane %v1089, 4
    %v1131 = vsel %vm212, %v1129, %v1087
    %v1132 = vrot.slane %v1089, 6
    %v1134 = vrot.slane %v1087, 6
    %v1136 = vsel %vm212, %v1132, %v1134
    %v1145 = vunpack.c.l.b16 %v1093
    %v1146 = vunpack.c.l.b16 %v1094
    %v1147 = vunpack.c.l.b16 %v1095
    %v1148 = vunpack.c.l.b16 %v1096
    %v1149 = vunpack.c.l.b16 %v1097
    %v1150 = vunpack.c.l.b16 %v1098
    %v1151 = vunpack.c.l.b16 %v1099
    %v1152 = vunpack.c.l.b16 %v1100
    %v1153 = vpack.c.b16 %v1146, %v1145
    %v1154 = vpack.c.b16 %v1148, %v1147
    %v1155 = vpack.c.b16 %v1150, %v1149
    %v1156 = vpack.c.b16 %v1152, %v1151
    %1161 = vmatprep.subr.bf16.mxu0 0
    %1162 = vmatpush1.bf16.msra.mxu0 %v1153
    %1163 = vmatprep.subr.bf16.mxu0 0
    %1164 = vmatpush1.bf16.msra.mxu0 %v1154
    %1165 = vmatprep.subr.bf16.mxu0 0
    %1166 = vmatpush1.bf16.msra.mxu0 %v1155
    %1167 = vmatprep.subr.bf16.mxu0 0
    %1168 = vmatpush1.bf16.msra.mxu0 %v1156
    %1169 = vmatprep.subr.bf16.mxu0 0
    %1170 = vmatpush1.bf16.msra.mxu0 0
    %1171 = vmatprep.subr.bf16.mxu0 0
    %1172 = vmatpush1.bf16.msra.mxu0 0
    %1173 = vmatprep.subr.bf16.mxu0 0
    %1174 = vmatpush1.bf16.msra.mxu0 0
    %1175 = vmatprep.subr.bf16.mxu0 0
    %1176 = vmatpush1.bf16.msra.mxu0 0
    %1177 = vmatprep.subr.bf16.mxu0 0
    %1178 = vmatpush1.bf16.msra.mxu0 0
    %1179 = vmatprep.subr.bf16.mxu0 0
    %1180 = vmatpush1.bf16.msra.mxu0 0
    %1181 = vmatprep.subr.bf16.mxu0 0
    %1182 = vmatpush1.bf16.msra.mxu0 0
    %1183 = vmatprep.subr.bf16.mxu0 0
    %1184 = vmatpush1.bf16.msra.mxu0 0
    %1185 = vmatprep.subr.bf16.mxu0 0
    %1186 = vmatpush1.bf16.msra.mxu0 0
    %1187 = vmatprep.subr.bf16.mxu0 0
    %1188 = vmatpush1.bf16.msra.mxu0 0
    %1189 = vmatprep.subr.bf16.mxu0 0
    %1190 = vmatpush1.bf16.msra.mxu0 0
    %1191 = vmatprep.subr.bf16.mxu0 0
    %1192 = vmatpush1.bf16.msra.mxu0 0
    %1193 = vmatprep.mubr.bf16.mxu0 0
    %1194 = vmatmul.mubr.bf16.gmra.mrb[0].mxu0 %v276
    %v1195 = vpop.f32.mrb[0].mxu0
    %v1196 = vadd.f32 0.0, %v1195
    %v1197 = vpop.f32.mrb[0].mxu0
    %v1198 = vpop.f32.mrb[0].mxu0
    %v1199 = vpop.f32.mrb[0].mxu0
    %1200 = vdwg.mxu0
    %v1201 = vadd.f32 %v1104, %v1196
    %v1202 = vxor.u32 %v1201, 2147483648
    %v1203 = vmul.f32 %v1202, 1.442695
    %v1204 = vpow.pop %v1203
    %v1205 = vadd.f32 %v1204, 1.0
    %v1206 = vrcp.pop %v1205
    %v1207 = vmul.f32 1.0, %v1206
    %v1208 = vtanh.pop %v1201
    %v1209 = vsel %vm78, %v1208, %v1207
    %1210 = vrot.lane.b32.xlu0 %v1209, 64
    %v1211 = vpop.permute.xlu0 %1210
    %v1212 = vmul.f32 %v1209, %v1211
    %v1213 = vmul.f32 %v1209, 0.0
    %1215 = vrot.lane.b32.xlu0 %v1212, 32
    %v1216 = vpop.permute.xlu0 %1215
    %v1218 = vadd.f32 %v1213, %v1216
    %v1219 = vtanh.pop %v1218
    %1221 = vrot.lane.b32.xlu0 %v1219, 64
    %v1222 = vpop.permute.xlu0 %1221
    %v1224 = vmul.f32 %v1209, %v1222
    %v1225 = vpack.c.bf16 %v1224, %v1224
    %1227 = vrot.lane.b32.xlu0 %v1225, 32
    %v1228 = vpop.permute.xlu0 %1227
    %1229 = vrot.lane.b32.xlu0 %v1225, 64
    %v1230 = vpop.permute.xlu0 %1229
    %v1233 = vsel %vm246, %v1228, %v1230
    %v1235 = vsel %vm249, %v1233, 0
    %v1237 = vsel %vm154, %v1235, 0
    %1239 = vmatprep.subr.bf16.mxu0 0
    %1240 = vmatpush1.bf16.msra.mxu0 %v1153
    %1241 = vmatprep.subr.bf16.mxu0 0
    %1242 = vmatpush1.bf16.msra.mxu0 %v1154
    %1243 = vmatprep.subr.bf16.mxu0 0
    %1244 = vmatpush1.bf16.msra.mxu0 %v1155
    %1245 = vmatprep.subr.bf16.mxu0 0
    %1246 = vmatpush1.bf16.msra.mxu0 %v1156
    %1247 = vmatprep.subr.bf16.mxu0 0
    %1248 = vmatpush1.bf16.msra.mxu0 0
    %1249 = vmatprep.subr.bf16.mxu0 0
    %1250 = vmatpush1.bf16.msra.mxu0 0
    %1251 = vmatprep.subr.bf16.mxu0 0
    %1252 = vmatpush1.bf16.msra.mxu0 0
    %1253 = vmatprep.subr.bf16.mxu0 0
    %1254 = vmatpush1.bf16.msra.mxu0 0
    %1255 = vmatprep.subr.bf16.mxu0 0
    %1256 = vmatpush1.bf16.msra.mxu0 0
    %1257 = vmatprep.subr.bf16.mxu0 0
    %1258 = vmatpush1.bf16.msra.mxu0 0
    %1259 = vmatprep.subr.bf16.mxu0 0
    %1260 = vmatpush1.bf16.msra.mxu0 0
    %1261 = vmatprep.subr.bf16.mxu0 0
    %1262 = vmatpush1.bf16.msra.mxu0 0
    %1263 = vmatprep.subr.bf16.mxu0 0
    %1264 = vmatpush1.bf16.msra.mxu0 0
    %1265 = vmatprep.subr.bf16.mxu0 0
    %1266 = vmatpush1.bf16.msra.mxu0 0
    %1267 = vmatprep.subr.bf16.mxu0 0
    %1268 = vmatpush1.bf16.msra.mxu0 0
    %1269 = vmatprep.subr.bf16.mxu0 0
    %1270 = vmatpush1.bf16.msra.mxu0 0
    %1271 = vmatprep.mubr.bf16.mxu0 0
    %1272 = vmatmul.mubr.bf16.gmra.mrb[0].mxu0 %v1237
    %v1273 = vpop.f32.mrb[0].mxu0
    %v1274 = vadd.f32 0.0, %v1273
    %v1275 = vpop.f32.mrb[0].mxu0
    %v1276 = vpop.f32.mrb[0].mxu0
    %v1277 = vpop.f32.mrb[0].mxu0
    %1278 = vdwg.mxu0
    %v1279 = vadd.f32 %v1110, %v1274
    %v1280 = vxor.u32 %v1279, 2147483648
    %v1281 = vmul.f32 %v1280, 1.442695
    %v1282 = vpow.pop %v1281
    %v1283 = vadd.f32 %v1282, 1.0
    %v1284 = vrcp.pop %v1283
    %v1285 = vmul.f32 1.0, %v1284
    %v1286 = vtanh.pop %v1279
    %v1287 = vsel %vm78, %v1286, %v1285
    %1288 = vrot.lane.b32.xlu0 %v1287, 64
    %v1289 = vpop.permute.xlu0 %1288
    %v1290 = vmul.f32 %v1287, %v1289
    %v1291 = vmul.f32 %v1287, %v1218
    %1293 = vrot.lane.b32.xlu0 %v1290, 32
    %v1294 = vpop.permute.xlu0 %1293
    %v1296 = vadd.f32 %v1291, %v1294
    %v1297 = vtanh.pop %v1296
    %1299 = vrot.lane.b32.xlu0 %v1297, 64
    %v1300 = vpop.permute.xlu0 %1299
    %v1302 = vmul.f32 %v1287, %v1300
    %v1303 = vpack.c.bf16 %v1302, %v1302
    %1305 = vrot.lane.b32.xlu0 %v1303, 32
    %v1306 = vpop.permute.xlu0 %1305
    %1307 = vrot.lane.b32.xlu0 %v1303, 64
    %v1308 = vpop.permute.xlu0 %1307
    %v1311 = vsel %vm246, %v1306, %v1308
    %v1313 = vsel %vm249, %v1311, 0
    %v1315 = vsel %vm154, %v1313, 0
    %1317 = vmatprep.subr.bf16.mxu0 0
    %1318 = vmatpush1.bf16.msra.mxu0 %v1153
    %1319 = vmatprep.subr.bf16.mxu0 0
    %1320 = vmatpush1.bf16.msra.mxu0 %v1154
    %1321 = vmatprep.subr.bf16.mxu0 0
    %1322 = vmatpush1.bf16.msra.mxu0 %v1155
    %1323 = vmatprep.subr.bf16.mxu0 0
    %1324 = vmatpush1.bf16.msra.mxu0 %v1156
    %1325 = vmatprep.subr.bf16.mxu0 0
    %1326 = vmatpush1.bf16.msra.mxu0 0
    %1327 = vmatprep.subr.bf16.mxu0 0
    %1328 = vmatpush1.bf16.msra.mxu0 0
    %1329 = vmatprep.subr.bf16.mxu0 0
    %1330 = vmatpush1.bf16.msra.mxu0 0
    %1331 = vmatprep.subr.bf16.mxu0 0
    %1332 = vmatpush1.bf16.msra.mxu0 0
    %1333 = vmatprep.subr.bf16.mxu0 0
    %1334 = vmatpush1.bf16.msra.mxu0 0
    %1335 = vmatprep.subr.bf16.mxu0 0
    %1336 = vmatpush1.bf16.msra.mxu0 0
    %1337 = vmatprep.subr.bf16.mxu0 0
    %1338 = vmatpush1.bf16.msra.mxu0 0
    %1339 = vmatprep.subr.bf16.mxu0 0
    %1340 = vmatpush1.bf16.msra.mxu0 0
    %1341 = vmatprep.subr.bf16.mxu0 0
    %1342 = vmatpush1.bf16.msra.mxu0 0
    %1343 = vmatprep.subr.bf16.mxu0 0
    %1344 = vmatpush1.bf16.msra.mxu0 0
    %1345 = vmatprep.subr.bf16.mxu0 0
    %1346 = vmatpush1.bf16.msra.mxu0 0
    %1347 = vmatprep.subr.bf16.mxu0 0
    %1348 = vmatpush1.bf16.msra.mxu0 0
    %1349 = vmatprep.mubr.bf16.mxu0 0
    %1350 = vmatmul.mubr.bf16.gmra.mrb[0].mxu0 %v1315
    %v1351 = vpop.f32.mrb[0].mxu0
    %v1352 = vadd.f32 0.0, %v1351
    %v1353 = vpop.f32.mrb[0].mxu0
    %v1354 = vpop.f32.mrb[0].mxu0
    %v1355 = vpop.f32.mrb[0].mxu0
    %1356 = vdwg.mxu0
    %v1357 = vadd.f32 %v1113, %v1352
    %v1358 = vxor.u32 %v1357, 2147483648
    %v1359 = vmul.f32 %v1358, 1.442695
    %v1360 = vpow.pop %v1359
    %v1361 = vadd.f32 %v1360, 1.0
    %v1362 = vrcp.pop %v1361
    %v1363 = vmul.f32 1.0, %v1362
    %v1364 = vtanh.pop %v1357
    %v1365 = vsel %vm78, %v1364, %v1363
    %1366 = vrot.lane.b32.xlu0 %v1365, 64
    %v1367 = vpop.permute.xlu0 %1366
    %v1368 = vmul.f32 %v1365, %v1367
    %v1369 = vmul.f32 %v1365, %v1296
    %1371 = vrot.lane.b32.xlu0 %v1368, 32
    %v1372 = vpop.permute.xlu0 %1371
    %v1374 = vadd.f32 %v1369, %v1372
    %v1375 = vtanh.pop %v1374
    %1377 = vrot.lane.b32.xlu0 %v1375, 64
    %v1378 = vpop.permute.xlu0 %1377
    %v1380 = vmul.f32 %v1365, %v1378
    %v1381 = vpack.c.bf16 %v1380, %v1380
    %1383 = vrot.lane.b32.xlu0 %v1381, 32
    %v1384 = vpop.permute.xlu0 %1383
    %1385 = vrot.lane.b32.xlu0 %v1381, 64
    %v1386 = vpop.permute.xlu0 %1385
    %v1389 = vsel %vm246, %v1384, %v1386
    %v1391 = vsel %vm249, %v1389, 0
    %v1393 = vsel %vm154, %v1391, 0
    %1395 = vmatprep.subr.bf16.mxu0 0
    %1396 = vmatpush1.bf16.msra.mxu0 %v1153
    %1397 = vmatprep.subr.bf16.mxu0 0
    %1398 = vmatpush1.bf16.msra.mxu0 %v1154
    %1399 = vmatprep.subr.bf16.mxu0 0
    %1400 = vmatpush1.bf16.msra.mxu0 %v1155
    %1401 = vmatprep.subr.bf16.mxu0 0
    %1402 = vmatpush1.bf16.msra.mxu0 %v1156
    %1403 = vmatprep.subr.bf16.mxu0 0
    %1404 = vmatpush1.bf16.msra.mxu0 0
    %1405 = vmatprep.subr.bf16.mxu0 0
    %1406 = vmatpush1.bf16.msra.mxu0 0
    %1407 = vmatprep.subr.bf16.mxu0 0
    %1408 = vmatpush1.bf16.msra.mxu0 0
    %1409 = vmatprep.subr.bf16.mxu0 0
    %1410 = vmatpush1.bf16.msra.mxu0 0
    %1411 = vmatprep.subr.bf16.mxu0 0
    %1412 = vmatpush1.bf16.msra.mxu0 0
    %1413 = vmatprep.subr.bf16.mxu0 0
    %1414 = vmatpush1.bf16.msra.mxu0 0
    %1415 = vmatprep.subr.bf16.mxu0 0
    %1416 = vmatpush1.bf16.msra.mxu0 0
    %1417 = vmatprep.subr.bf16.mxu0 0
    %1418 = vmatpush1.bf16.msra.mxu0 0
    %1419 = vmatprep.subr.bf16.mxu0 0
    %1420 = vmatpush1.bf16.msra.mxu0 0
    %1421 = vmatprep.subr.bf16.mxu0 0
    %1422 = vmatpush1.bf16.msra.mxu0 0
    %1423 = vmatprep.subr.bf16.mxu0 0
    %1424 = vmatpush1.bf16.msra.mxu0 0
    %1425 = vmatprep.subr.bf16.mxu0 0
    %1426 = vmatpush1.bf16.msra.mxu0 0
    %1427 = vmatprep.mubr.bf16.mxu0 0
    %1428 = vmatmul.mubr.bf16.gmra.mrb[0].mxu0 %v1393
    %v1429 = vpop.f32.mrb[0].mxu0
    %v1430 = vadd.f32 0.0, %v1429
    %v1431 = vpop.f32.mrb[0].mxu0
    %v1432 = vpop.f32.mrb[0].mxu0
    %v1433 = vpop.f32.mrb[0].mxu0
    %1434 = vdwg.mxu0
    %v1435 = vadd.f32 %v1118, %v1430
    %v1436 = vxor.u32 %v1435, 2147483648
    %v1437 = vmul.f32 %v1436, 1.442695
    %v1438 = vpow.pop %v1437
    %v1439 = vadd.f32 %v1438, 1.0
    %v1440 = vrcp.pop %v1439
    %v1441 = vmul.f32 1.0, %v1440
    %v1442 = vtanh.pop %v1435
    %v1443 = vsel %vm78, %v1442, %v1441
    %1444 = vrot.lane.b32.xlu0 %v1443, 64
    %v1445 = vpop.permute.xlu0 %1444
    %v1446 = vmul.f32 %v1443, %v1445
    %v1447 = vmul.f32 %v1443, %v1374
    %1449 = vrot.lane.b32.xlu0 %v1446, 32
    %v1450 = vpop.permute.xlu0 %1449
    %v1452 = vadd.f32 %v1447, %v1450
    %v1453 = vtanh.pop %v1452
    %1455 = vrot.lane.b32.xlu0 %v1453, 64
    %v1456 = vpop.permute.xlu0 %1455
    %v1458 = vmul.f32 %v1443, %v1456
    %v1459 = vpack.c.bf16 %v1458, %v1458
    %1461 = vrot.lane.b32.xlu0 %v1459, 32
    %v1462 = vpop.permute.xlu0 %1461
    %1463 = vrot.lane.b32.xlu0 %v1459, 64
    %v1464 = vpop.permute.xlu0 %1463
    %v1467 = vsel %vm246, %v1462, %v1464
    %v1469 = vsel %vm249, %v1467, 0
    %v1471 = vsel %vm154, %v1469, 0
    %1473 = vmatprep.subr.bf16.mxu0 0
    %1474 = vmatpush1.bf16.msra.mxu0 %v1153
    %1475 = vmatprep.subr.bf16.mxu0 0
    %1476 = vmatpush1.bf16.msra.mxu0 %v1154
    %1477 = vmatprep.subr.bf16.mxu0 0
    %1478 = vmatpush1.bf16.msra.mxu0 %v1155
    %1479 = vmatprep.subr.bf16.mxu0 0
    %1480 = vmatpush1.bf16.msra.mxu0 %v1156
    %1481 = vmatprep.subr.bf16.mxu0 0
    %1482 = vmatpush1.bf16.msra.mxu0 0
    %1483 = vmatprep.subr.bf16.mxu0 0
    %1484 = vmatpush1.bf16.msra.mxu0 0
    %1485 = vmatprep.subr.bf16.mxu0 0
    %1486 = vmatpush1.bf16.msra.mxu0 0
    %1487 = vmatprep.subr.bf16.mxu0 0
    %1488 = vmatpush1.bf16.msra.mxu0 0
    %1489 = vmatprep.subr.bf16.mxu0 0
    %1490 = vmatpush1.bf16.msra.mxu0 0
    %1491 = vmatprep.subr.bf16.mxu0 0
    %1492 = vmatpush1.bf16.msra.mxu0 0
    %1493 = vmatprep.subr.bf16.mxu0 0
    %1494 = vmatpush1.bf16.msra.mxu0 0
    %1495 = vmatprep.subr.bf16.mxu0 0
    %1496 = vmatpush1.bf16.msra.mxu0 0
    %1497 = vmatprep.subr.bf16.mxu0 0
    %1498 = vmatpush1.bf16.msra.mxu0 0
    %1499 = vmatprep.subr.bf16.mxu0 0
    %1500 = vmatpush1.bf16.msra.mxu0 0
    %1501 = vmatprep.subr.bf16.mxu0 0
    %1502 = vmatpush1.bf16.msra.mxu0 0
    %1503 = vmatprep.subr.bf16.mxu0 0
    %1504 = vmatpush1.bf16.msra.mxu0 0
    %1505 = vmatprep.mubr.bf16.mxu0 0
    %1506 = vmatmul.mubr.bf16.gmra.mrb[0].mxu0 %v1471
    %v1507 = vpop.f32.mrb[0].mxu0
    %v1508 = vadd.f32 0.0, %v1507
    %v1509 = vpop.f32.mrb[0].mxu0
    %v1510 = vpop.f32.mrb[0].mxu0
    %v1511 = vpop.f32.mrb[0].mxu0
    %1512 = vdwg.mxu0
    %v1513 = vadd.f32 %v1122, %v1508
    %v1514 = vxor.u32 %v1513, 2147483648
    %v1515 = vmul.f32 %v1514, 1.442695
    %v1516 = vpow.pop %v1515
    %v1517 = vadd.f32 %v1516, 1.0
    %v1518 = vrcp.pop %v1517
    %v1519 = vmul.f32 1.0, %v1518
    %v1520 = vtanh.pop %v1513
    %v1521 = vsel %vm78, %v1520, %v1519
    %1522 = vrot.lane.b32.xlu0 %v1521, 64
    %v1523 = vpop.permute.xlu0 %1522
    %v1524 = vmul.f32 %v1521, %v1523
    %v1525 = vmul.f32 %v1521, %v1452
    %1527 = vrot.lane.b32.xlu0 %v1524, 32
    %v1528 = vpop.permute.xlu0 %1527
    %v1530 = vadd.f32 %v1525, %v1528
    %v1531 = vtanh.pop %v1530
    %1533 = vrot.lane.b32.xlu0 %v1531, 64
    %v1534 = vpop.permute.xlu0 %1533
    %v1536 = vmul.f32 %v1521, %v1534
    %v1537 = vpack.c.bf16 %v1536, %v1536
    %1539 = vrot.lane.b32.xlu0 %v1537, 32
    %v1540 = vpop.permute.xlu0 %1539
    %1541 = vrot.lane.b32.xlu0 %v1537, 64
    %v1542 = vpop.permute.xlu0 %1541
    %v1545 = vsel %vm246, %v1540, %v1542
    %v1547 = vsel %vm249, %v1545, 0
    %v1549 = vsel %vm154, %v1547, 0
    %1551 = vmatprep.subr.bf16.mxu0 0
    %1552 = vmatpush1.bf16.msra.mxu0 %v1153
    %1553 = vmatprep.subr.bf16.mxu0 0
    %1554 = vmatpush1.bf16.msra.mxu0 %v1154
    %1555 = vmatprep.subr.bf16.mxu0 0
    %1556 = vmatpush1.bf16.msra.mxu0 %v1155
    %1557 = vmatprep.subr.bf16.mxu0 0
    %1558 = vmatpush1.bf16.msra.mxu0 %v1156
    %1559 = vmatprep.subr.bf16.mxu0 0
    %1560 = vmatpush1.bf16.msra.mxu0 0
    %1561 = vmatprep.subr.bf16.mxu0 0
    %1562 = vmatpush1.bf16.msra.mxu0 0
    %1563 = vmatprep.subr.bf16.mxu0 0
    %1564 = vmatpush1.bf16.msra.mxu0 0
    %1565 = vmatprep.subr.bf16.mxu0 0
    %1566 = vmatpush1.bf16.msra.mxu0 0
    %1567 = vmatprep.subr.bf16.mxu0 0
    %1568 = vmatpush1.bf16.msra.mxu0 0
    %1569 = vmatprep.subr.bf16.mxu0 0
    %1570 = vmatpush1.bf16.msra.mxu0 0
    %1571 = vmatprep.subr.bf16.mxu0 0
    %1572 = vmatpush1.bf16.msra.mxu0 0
    %1573 = vmatprep.subr.bf16.mxu0 0
    %1574 = vmatpush1.bf16.msra.mxu0 0
    %1575 = vmatprep.subr.bf16.mxu0 0
    %1576 = vmatpush1.bf16.msra.mxu0 0
    %1577 = vmatprep.subr.bf16.mxu0 0
    %1578 = vmatpush1.bf16.msra.mxu0 0
    %1579 = vmatprep.subr.bf16.mxu0 0
    %1580 = vmatpush1.bf16.msra.mxu0 0
    %1581 = vmatprep.subr.bf16.mxu0 0
    %1582 = vmatpush1.bf16.msra.mxu0 0
    %1583 = vmatprep.mubr.bf16.mxu0 0
    %1584 = vmatmul.mubr.bf16.gmra.mrb[0].mxu0 %v1549
    %v1585 = vpop.f32.mrb[0].mxu0
    %v1586 = vadd.f32 0.0, %v1585
    %v1587 = vpop.f32.mrb[0].mxu0
    %v1588 = vpop.f32.mrb[0].mxu0
    %v1589 = vpop.f32.mrb[0].mxu0
    %1590 = vdwg.mxu0
    %v1591 = vadd.f32 %v1128, %v1586
    %v1592 = vxor.u32 %v1591, 2147483648
    %v1593 = vmul.f32 %v1592, 1.442695
    %v1594 = vpow.pop %v1593
    %v1595 = vadd.f32 %v1594, 1.0
    %v1596 = vrcp.pop %v1595
    %v1597 = vmul.f32 1.0, %v1596
    %v1598 = vtanh.pop %v1591
    %v1599 = vsel %vm78, %v1598, %v1597
    %1600 = vrot.lane.b32.xlu0 %v1599, 64
    %v1601 = vpop.permute.xlu0 %1600
    %v1602 = vmul.f32 %v1599, %v1601
    %v1603 = vmul.f32 %v1599, %v1530
    %1605 = vrot.lane.b32.xlu0 %v1602, 32
    %v1606 = vpop.permute.xlu0 %1605
    %v1608 = vadd.f32 %v1603, %v1606
    %v1609 = vtanh.pop %v1608
    %1611 = vrot.lane.b32.xlu0 %v1609, 64
    %v1612 = vpop.permute.xlu0 %1611
    %v1614 = vmul.f32 %v1599, %v1612
    %v1615 = vpack.c.bf16 %v1614, %v1614
    %1617 = vrot.lane.b32.xlu0 %v1615, 32
    %v1618 = vpop.permute.xlu0 %1617
    %1619 = vrot.lane.b32.xlu0 %v1615, 64
    %v1620 = vpop.permute.xlu0 %1619
    %v1623 = vsel %vm246, %v1618, %v1620
    %v1625 = vsel %vm249, %v1623, 0
    %v1627 = vsel %vm154, %v1625, 0
    %1629 = vmatprep.subr.bf16.mxu0 0
    %1630 = vmatpush1.bf16.msra.mxu0 %v1153
    %1631 = vmatprep.subr.bf16.mxu0 0
    %1632 = vmatpush1.bf16.msra.mxu0 %v1154
    %1633 = vmatprep.subr.bf16.mxu0 0
    %1634 = vmatpush1.bf16.msra.mxu0 %v1155
    %1635 = vmatprep.subr.bf16.mxu0 0
    %1636 = vmatpush1.bf16.msra.mxu0 %v1156
    %1637 = vmatprep.subr.bf16.mxu0 0
    %1638 = vmatpush1.bf16.msra.mxu0 0
    %1639 = vmatprep.subr.bf16.mxu0 0
    %1640 = vmatpush1.bf16.msra.mxu0 0
    %1641 = vmatprep.subr.bf16.mxu0 0
    %1642 = vmatpush1.bf16.msra.mxu0 0
    %1643 = vmatprep.subr.bf16.mxu0 0
    %1644 = vmatpush1.bf16.msra.mxu0 0
    %1645 = vmatprep.subr.bf16.mxu0 0
    %1646 = vmatpush1.bf16.msra.mxu0 0
    %1647 = vmatprep.subr.bf16.mxu0 0
    %1648 = vmatpush1.bf16.msra.mxu0 0
    %1649 = vmatprep.subr.bf16.mxu0 0
    %1650 = vmatpush1.bf16.msra.mxu0 0
    %1651 = vmatprep.subr.bf16.mxu0 0
    %1652 = vmatpush1.bf16.msra.mxu0 0
    %1653 = vmatprep.subr.bf16.mxu0 0
    %1654 = vmatpush1.bf16.msra.mxu0 0
    %1655 = vmatprep.subr.bf16.mxu0 0
    %1656 = vmatpush1.bf16.msra.mxu0 0
    %1657 = vmatprep.subr.bf16.mxu0 0
    %1658 = vmatpush1.bf16.msra.mxu0 0
    %1659 = vmatprep.subr.bf16.mxu0 0
    %1660 = vmatpush1.bf16.msra.mxu0 0
    %1661 = vmatprep.mubr.bf16.mxu0 0
    %1662 = vmatmul.mubr.bf16.gmra.mrb[0].mxu0 %v1627
    %v1663 = vpop.f32.mrb[0].mxu0
    %v1664 = vadd.f32 0.0, %v1663
    %v1665 = vpop.f32.mrb[0].mxu0
    %v1666 = vpop.f32.mrb[0].mxu0
    %v1667 = vpop.f32.mrb[0].mxu0
    %1668 = vdwg.mxu0
    %v1669 = vadd.f32 %v1131, %v1664
    %v1670 = vxor.u32 %v1669, 2147483648
    %v1671 = vmul.f32 %v1670, 1.442695
    %v1672 = vpow.pop %v1671
    %v1673 = vadd.f32 %v1672, 1.0
    %v1674 = vrcp.pop %v1673
    %v1675 = vmul.f32 1.0, %v1674
    %v1676 = vtanh.pop %v1669
    %v1677 = vsel %vm78, %v1676, %v1675
    %1678 = vrot.lane.b32.xlu0 %v1677, 64
    %v1679 = vpop.permute.xlu0 %1678
    %v1680 = vmul.f32 %v1677, %v1679
    %v1681 = vmul.f32 %v1677, %v1608
    %1683 = vrot.lane.b32.xlu0 %v1680, 32
    %v1684 = vpop.permute.xlu0 %1683
    %v1686 = vadd.f32 %v1681, %v1684
    %v1687 = vtanh.pop %v1686
    %1689 = vrot.lane.b32.xlu0 %v1687, 64
    %v1690 = vpop.permute.xlu0 %1689
    %v1692 = vmul.f32 %v1677, %v1690
    %v1693 = vpack.c.bf16 %v1692, %v1692
    %1695 = vrot.lane.b32.xlu0 %v1693, 32
    %v1696 = vpop.permute.xlu0 %1695
    %1697 = vrot.lane.b32.xlu0 %v1693, 64
    %v1698 = vpop.permute.xlu0 %1697
    %v1701 = vsel %vm246, %v1696, %v1698
    %v1703 = vsel %vm249, %v1701, 0
    %v1705 = vsel %vm154, %v1703, 0
    %1707 = vmatprep.subr.bf16.mxu0 0
    %1708 = vmatpush1.bf16.msra.mxu0 %v1153
    %1709 = vmatprep.subr.bf16.mxu0 0
    %1710 = vmatpush1.bf16.msra.mxu0 %v1154
    %1711 = vmatprep.subr.bf16.mxu0 0
    %1712 = vmatpush1.bf16.msra.mxu0 %v1155
    %1713 = vmatprep.subr.bf16.mxu0 0
    %1714 = vmatpush1.bf16.msra.mxu0 %v1156
    %1715 = vmatprep.subr.bf16.mxu0 0
    %1716 = vmatpush1.bf16.msra.mxu0 0
    %1717 = vmatprep.subr.bf16.mxu0 0
    %1718 = vmatpush1.bf16.msra.mxu0 0
    %1719 = vmatprep.subr.bf16.mxu0 0
    %1720 = vmatpush1.bf16.msra.mxu0 0
    %1721 = vmatprep.subr.bf16.mxu0 0
    %1722 = vmatpush1.bf16.msra.mxu0 0
    %1723 = vmatprep.subr.bf16.mxu0 0
    %1724 = vmatpush1.bf16.msra.mxu0 0
    %1725 = vmatprep.subr.bf16.mxu0 0
    %1726 = vmatpush1.bf16.msra.mxu0 0
    %1727 = vmatprep.subr.bf16.mxu0 0
    %1728 = vmatpush1.bf16.msra.mxu0 0
    %1729 = vmatprep.subr.bf16.mxu0 0
    %1730 = vmatpush1.bf16.msra.mxu0 0
    %1731 = vmatprep.subr.bf16.mxu0 0
    %1732 = vmatpush1.bf16.msra.mxu0 0
    %1733 = vmatprep.subr.bf16.mxu0 0
    %1734 = vmatpush1.bf16.msra.mxu0 0
    %1735 = vmatprep.subr.bf16.mxu0 0
    %1736 = vmatpush1.bf16.msra.mxu0 0
    %1737 = vmatprep.subr.bf16.mxu0 0
    %1738 = vmatpush1.bf16.msra.mxu0 0
    %1739 = vmatprep.mubr.bf16.mxu0 0
    %1740 = vmatmul.mubr.bf16.gmra.mrb[0].mxu0 %v1705
    %v1741 = vpop.f32.mrb[0].mxu0
    %v1742 = vadd.f32 0.0, %v1741
    %v1743 = vpop.f32.mrb[0].mxu0
    %v1744 = vpop.f32.mrb[0].mxu0
    %v1745 = vpop.f32.mrb[0].mxu0
    %1746 = vdwg.mxu0
    %v1747 = vadd.f32 %v1136, %v1742
    %v1748 = vxor.u32 %v1747, 2147483648
    %v1749 = vmul.f32 %v1748, 1.442695
    %v1750 = vpow.pop %v1749
    %v1751 = vadd.f32 %v1750, 1.0
    %v1752 = vrcp.pop %v1751
    %v1753 = vmul.f32 1.0, %v1752
    %v1754 = vtanh.pop %v1747
    %v1755 = vsel %vm78, %v1754, %v1753
    %1756 = vrot.lane.b32.xlu0 %v1755, 64
    %v1757 = vpop.permute.xlu0 %1756
    %v1758 = vmul.f32 %v1755, %v1757
    %v1759 = vmul.f32 %v1755, %v1686
    %1761 = vrot.lane.b32.xlu0 %v1758, 32
    %v1762 = vpop.permute.xlu0 %1761
    %v1764 = vadd.f32 %v1759, %v1762
    %v1765 = vtanh.pop %v1764
    %1767 = vrot.lane.b32.xlu0 %v1765, 64
    %v1768 = vpop.permute.xlu0 %1767
    %v1770 = vmul.f32 %v1755, %v1768
    %1772 = vrot.lane.b32.xlu0 %v1770, 32
    %v1773 = vpop.permute.xlu0 %1772
    %v1775 = vrot.slane %v1770, 2
    %1776 = vrot.lane.b32.xlu0 %v1775, 64
    %v1777 = vpop.permute.xlu0 %1776
    %v1779 = vsel %vm246, %v1773, %v1777
    %v1780 = vpack.c.bf16 %v1779, %v1779
    %v1781 = vld [vmem:[%s7] sm:$0xf]
    %v1782 = vld [vmem:[%s7 + $0x4] sm:$0xf]
    %v1783 = vld [vmem:[%s7 + $0x8] sm:$0xf]
    %v1784 = vld [vmem:[%s7 + $0xc] sm:$0xf]
    %v1785 = vld [vmem:[%s7 + $0x10] sm:$0xf]
    %v1786 = vld [vmem:[%s7 + $0x14] sm:$0xf]
    %v1787 = vld [vmem:[%s7 + $0x18] sm:$0xf]
    %v1788 = vld [vmem:[%s7 + $0x1c] sm:$0xf]
    %v1789 = vld [vmem:[%s8] sm:$0x1]
    %v1791 = vlaneseq
    %v1792 = vshrl.u32 %v1791, 7
    %v1793 = vsub.s32 0, %v1792
    %v1794 = vrot.slane %v1789, %v1793
    %v1804 = vunpack.c.l.b16 %v1781
    %v1805 = vunpack.c.l.b16 %v1782
    %v1806 = vunpack.c.l.b16 %v1783
    %v1807 = vunpack.c.l.b16 %v1784
    %v1808 = vunpack.c.l.b16 %v1785
    %v1809 = vunpack.c.l.b16 %v1786
    %v1810 = vunpack.c.l.b16 %v1787
    %v1811 = vunpack.c.l.b16 %v1788
    %v1812 = vpack.c.b16 %v1805, %v1804
    %v1813 = vpack.c.b16 %v1807, %v1806
    %v1814 = vpack.c.b16 %v1809, %v1808
    %v1815 = vpack.c.b16 %v1811, %v1810
    %v1821 = vsel %vm154, %v1780, 0
    %1823 = vmatprep.subr.bf16.mxu0 0
    %1824 = vmatpush1.bf16.msra.mxu0 %v1812
    %1825 = vmatprep.subr.bf16.mxu0 0
    %1826 = vmatpush1.bf16.msra.mxu0 %v1813
    %1827 = vmatprep.subr.bf16.mxu0 0
    %1828 = vmatpush1.bf16.msra.mxu0 %v1814
    %1829 = vmatprep.subr.bf16.mxu0 0
    %1830 = vmatpush1.bf16.msra.mxu0 %v1815
    %1831 = vmatprep.subr.bf16.mxu0 0
    %1832 = vmatpush1.bf16.msra.mxu0 0
    %1833 = vmatprep.subr.bf16.mxu0 0
    %1834 = vmatpush1.bf16.msra.mxu0 0
    %1835 = vmatprep.subr.bf16.mxu0 0
    %1836 = vmatpush1.bf16.msra.mxu0 0
    %1837 = vmatprep.subr.bf16.mxu0 0
    %1838 = vmatpush1.bf16.msra.mxu0 0
    %1839 = vmatprep.subr.bf16.mxu0 0
    %1840 = vmatpush1.bf16.msra.mxu0 0
    %1841 = vmatprep.subr.bf16.mxu0 0
    %1842 = vmatpush1.bf16.msra.mxu0 0
    %1843 = vmatprep.subr.bf16.mxu0 0
    %1844 = vmatpush1.bf16.msra.mxu0 0
    %1845 = vmatprep.subr.bf16.mxu0 0
    %1846 = vmatpush1.bf16.msra.mxu0 0
    %1847 = vmatprep.subr.bf16.mxu0 0
    %1848 = vmatpush1.bf16.msra.mxu0 0
    %1849 = vmatprep.subr.bf16.mxu0 0
    %1850 = vmatpush1.bf16.msra.mxu0 0
    %1851 = vmatprep.subr.bf16.mxu0 0
    %1852 = vmatpush1.bf16.msra.mxu0 0
    %1853 = vmatprep.subr.bf16.mxu0 0
    %1854 = vmatpush1.bf16.msra.mxu0 0
    %1855 = vmatprep.mubr.bf16.mxu0 0
    %1856 = vmatmul.mubr.bf16.gmra.mrb[0].mxu0 %v1821
    %v1857 = vpop.f32.mrb[0].mxu0
    %v1858 = vadd.f32 %v1794, %v1857
    %v1859 = vpop.f32.mrb[0].mxu0
    %v1860 = vpop.f32.mrb[0].mxu0
    %v1861 = vpop.f32.mrb[0].mxu0
    %1862 = vdwg.mxu0
    %v1863 = vmax.f32 %v1858, 0.0
    %v1864 = vpack.c.bf16 %v1863, %v1863
    %v1865 = vld [vmem:[%s9] sm:$0xf]
    %v1866 = vld [vmem:[%s9 + $0x4] sm:$0xf]
    %v1867 = vld [vmem:[%s9 + $0x8] sm:$0xf]
    %v1868 = vld [vmem:[%s9 + $0xc] sm:$0xf]
    %v1869 = vld [vmem:[%s10] sm:$0x1]
    %v1871 = vlaneseq
    %v1872 = vshrl.u32 %v1871, 7
    %v1873 = vsub.s32 0, %v1872
    %v1874 = vrot.slane %v1869, %v1873
    %v1880 = vunpack.c.l.b16 %v1865
    %v1881 = vunpack.c.l.b16 %v1866
    %v1882 = vunpack.c.l.b16 %v1867
    %v1883 = vunpack.c.l.b16 %v1868
    %v1884 = vpack.c.b16 %v1881, %v1880
    %v1885 = vpack.c.b16 %v1883, %v1882
    %v1889 = vsel %vm246, %v1864, 0
    %1891 = vmatprep.subr.bf16.mxu0 0
    %1892 = vmatpush1.bf16.msra.mxu0 %v1884
    %1893 = vmatprep.subr.bf16.mxu0 0
    %1894 = vmatpush1.bf16.msra.mxu0 %v1885
    %1895 = vmatprep.subr.bf16.mxu0 0
    %1896 = vmatpush1.bf16.msra.mxu0 0
    %1897 = vmatprep.subr.bf16.mxu0 0
    %1898 = vmatpush1.bf16.msra.mxu0 0
    %1899 = vmatprep.subr.bf16.mxu0 0
    %1900 = vmatpush1.bf16.msra.mxu0 0
    %1901 = vmatprep.subr.bf16.mxu0 0
    %1902 = vmatpush1.bf16.msra.mxu0 0
    %1903 = vmatprep.subr.bf16.mxu0 0
    %1904 = vmatpush1.bf16.msra.mxu0 0
    %1905 = vmatprep.subr.bf16.mxu0 0
    %1906 = vmatpush1.bf16.msra.mxu0 0
    %1907 = vmatprep.subr.bf16.mxu0 0
    %1908 = vmatpush1.bf16.msra.mxu0 0
    %1909 = vmatprep.subr.bf16.mxu0 0
    %1910 = vmatpush1.bf16.msra.mxu0 0
    %1911 = vmatprep.subr.bf16.mxu0 0
    %1912 = vmatpush1.bf16.msra.mxu0 0
    %1913 = vmatprep.subr.bf16.mxu0 0
    %1914 = vmatpush1.bf16.msra.mxu0 0
    %1915 = vmatprep.subr.bf16.mxu0 0
    %1916 = vmatpush1.bf16.msra.mxu0 0
    %1917 = vmatprep.subr.bf16.mxu0 0
    %1918 = vmatpush1.bf16.msra.mxu0 0
    %1919 = vmatprep.subr.bf16.mxu0 0
    %1920 = vmatpush1.bf16.msra.mxu0 0
    %1921 = vmatprep.subr.bf16.mxu0 0
    %1922 = vmatpush1.bf16.msra.mxu0 0
    %1923 = vmatprep.mubr.bf16.mxu0 0
    %1924 = vmatmul.mubr.bf16.gmra.mrb[0].mxu0 %v1889
    %v1925 = vpop.f32.mrb[0].mxu0
    %v1926 = vadd.f32 %v1874, %v1925
    %v1927 = vpop.f32.mrb[0].mxu0
    %v1928 = vpop.f32.mrb[0].mxu0
    %v1929 = vpop.f32.mrb[0].mxu0
    %1930 = vdwg.mxu0
    %vm1931 = vcmask 9216
    %v1932 = vsel %vm1931, %v1926, -inf
    %1933 = vmax.xlane.f32.xlu0 %v1932
    %v1934 = vpop.xlane.xlu0 %1933
    %v1935 = vsub.f32 %v1926, %v1934
    %v1936 = vmul.f32 %v1935, 1.442695
    %v1937 = vpow.pop %v1936
    %v1938 = vsel %vm1931, %v1937, 0.0
    %1939 = vadd.xlane.f32.xlu0 %v1938
    %v1940 = vpop.xlane.xlu0 %1939
    %v1941 = vlog2.pop %v1940
    %v1942 = vmul.f32 %v1941, 0.6931472
    %v1943 = vadd.f32 %v1934, %v1942
    %v1944 = vsub.f32 %v1926, %v1943
    %1945 = vst.msk [vmem:[#allocation7] sm:$0x3] %vm1931, %v1944
    // Predicated region
    $region54: #{forward.1} parent=1 // pred_check
      _
    $region55: #{forward.1} parent=1 // pred_check_branch
      %1947 = sbr.rel (0) target = $region57
    $region56: #{forward.1} parent=1 // pred_region
      %s1949 = ssub.s32 32, 32
      %1950 = vsyncadd [#allocation4], %s1949
      %s1952 = sshll.u32 [#allocation7], 4
      %s1953 = int_to_ptr.vmem [resolvable:$true] %s1952
      %1955 = dma.vmem_to_hbm [thread:$0]  %s1953, 32, %s11, [#allocation4]
    $region57: #{forward.1} parent=1 // pred_fallthru
      _
    // Predicated region
    $region58: #{forward.1} parent=1 // pred_check
      _
    $region59: #{forward.1} parent=1 // pred_check_branch
      %1957 = sbr.rel (0) target = $region61
    $region60: #{forward.1} parent=1 // pred_region
      %1958 = dma.done [#allocation4], 32
    $region61: #{forward.1} parent=1 // pred_fallthru
      _
    %1959 = vsyncpa [#allocation3], 1
    %1960 = vsyncpa [#allocation6], 1
    %1961 = vsyncpa [#allocation4], 1

</llo_original>
